<compile_context>
chip_gen: v5e
topology: v5e:2x2
jax: 0.10.0
libtpu: 0.0.40
codegen_flags: <defaults>
</compile_context>

<pallas_src>
import numpy as np
import jax
import jax.numpy as jnp
from jax.experimental import pallas as pl
from jax.experimental.pallas import tpu as pltpu

IN_H = IN_W = 28        # implied by the 120-feature flatten in the module
BLOCK_B = 8             # images per grid step (VMEM use ~ a few MB on all gens)


# ------------------------------ fused kernel -------------------------------

def _lenet_kernel(x_ref, w1e_ref, w1o_ref, b1_ref, w2e_ref, w2o_ref, b2_ref,
                  wf_ref, bf_ref, o_ref):
    f32 = jnp.float32
    B = x_ref.shape[0]
    x = x_ref[...]                                      # (B, 28, 28)

    # conv1 (1->6, k=5) fused with the W direction of maxpool1.
    # r1 lanes: (kernel_row i, input column) -> 5*28 = 140.
    r1 = jnp.concatenate([x[:, i:i + 24, :] for i in range(5)], axis=-1)
    r1 = r1.reshape(B * 24, 5 * 28)                     # rows (b, h)
    y1e = jnp.dot(r1, w1e_ref[...], preferred_element_type=f32) + b1_ref[...]
    y1o = jnp.dot(r1, w1o_ref[...], preferred_element_type=f32) + b1_ref[...]
    t1 = jnp.maximum(y1e, y1o)                          # (B*24, 72) lanes (wo, c)

    # maxpool1, H direction: adjacent-row pairs via rows-split reshape.
    t1 = t1.reshape(B * 12, 2, 72)
    a1 = jnp.maximum(t1[:, 0, :], t1[:, 1, :])          # (B*12, 72) rows (b, ho)

    # conv2 (6->16, k=5) fused with the W direction of maxpool2.
    # r2 lanes: (kernel_row i, pooled column, cin) -> 5*12*6 = 360.
    a1 = a1.reshape(B, 12, 72)
    r2 = jnp.concatenate([a1[:, i:i + 8, :] for i in range(5)], axis=-1)
    r2 = r2.reshape(B * 8, 5 * 72)                      # rows (b, h2)
    y2e = jnp.dot(r2, w2e_ref[...], preferred_element_type=f32) + b2_ref[...]
    y2o = jnp.dot(r2, w2o_ref[...], preferred_element_type=f32) + b2_ref[...]
    t2 = jnp.maximum(y2e, y2o)                          # (B*8, 64) lanes (wo2, c)

    # maxpool2, H direction.
    t2 = t2.reshape(B * 4, 2, 64)
    a2 = jnp.maximum(t2[:, 0, :], t2[:, 1, :])          # (B*4, 64) rows (b, ho2)
    a2 = a2.reshape(B, 4, 64)

    # Folded dense tail: conv3 (4x4 over the full 4x4 map) + fc + linear + out,
    # all affine -> one precomputed (256, 10) map.  Accumulate per kernel row
    # ho2 so no lane-dim flatten / reshape is needed.
    acc = jnp.zeros((B, 10), f32) + bf_ref[...]
    for h in range(4):                                  # flatten order (kh, kw, cin)
        acc = acc + jnp.dot(a2[:, h, :], wf_ref[h * 64:(h + 1) * 64, :],
                            preferred_element_type=f32)
    o_ref[...] = acc


# --------------------------- host-side weight prep --------------------------

def _banded_conv_weights(w, b, win):
    """Fold a VALID stride-1 conv + the column (W) selection of a 2x2/stride-2
    max-pool into two banded matmul weights.

    Matmul input lanes : i*win*cin + w_in*cin + cin_idx   (i = kernel row)
    Matmul output lanes: wo*cout + co                      (wo = pooled column)
    Parity p in {0,1} selects conv output column w = 2*wo + p.
    """
    cout, cin, kh, kw = w.shape
    assert (win - kw + 1) % 2 == 0, "conv output width must be even for 2x2 pool"
    wout = (win - kw + 1) // 2
    kband, kcol = kh * win * cin, kh * kw * cin
    w_col = jnp.transpose(w, (2, 3, 1, 0)).reshape(kcol, cout)   # (kh*kw*cin, cout)
    mats = []
    for p in (0, 1):
        place = np.zeros((wout, kband, kcol), np.float32)        # constant 0/1 map
        for i in range(kh):
            for j in range(kw):
                for c in range(cin):
                    k = (i * kw + j) * cin + c
                    for wo in range(wout):
                        r = (i * win + 2 * wo + p + j) * cin + c
                        place[wo, r, k] = 1.0
        wb = jnp.einsum("wrk,kc->rwc", jnp.asarray(place), w_col)
        mats.append(wb.reshape(kband, wout * cout))
    bias = jnp.tile(b.reshape(1, 1, cout), (1, wout, 1)).reshape(1, wout * cout)
    return mats[0], mats[1], bias


def _folded_tail(params):
    # conv3 on a 4x4 map == dense (256 -> 120); then fc, linear, out: all affine.
    w3 = jnp.transpose(params["conv3_w"], (2, 3, 1, 0)).reshape(256, 120)
    fcw, lnw, otw = params["fc_w"].T, params["linear_w"].T, params["out_w"].T
    wf = w3 @ fcw @ lnw @ otw                                    # (256, 10)
    bf = (((params["conv3_b"] @ fcw + params["fc_b"]) @ lnw
           + params["linear_b"]) @ otw + params["out_b"]).reshape(1, 10)
    return wf, bf


def init_params(key):
    # PyTorch-default-style uniform init, stored in torch layouts.
    def u(k, shape, fan_in):
        bnd = 1.0 / jnp.sqrt(jnp.float32(fan_in))
        return jax.random.uniform(k, shape, jnp.float32, -bnd, bnd)
    ks = jax.random.split(key, 12)
    return {
        "conv1_w": u(ks[0], (6, 1, 5, 5), 25),     "conv1_b": u(ks[1], (6,), 25),
        "conv2_w": u(ks[2], (16, 6, 5, 5), 150),   "conv2_b": u(ks[3], (16,), 150),
        "conv3_w": u(ks[4], (120, 16, 4, 4), 256), "conv3_b": u(ks[5], (120,), 256),
        "fc_w": u(ks[6], (128, 120), 120),         "fc_b": u(ks[7], (128,), 120),
        "linear_w": u(ks[8], (64, 128), 128),      "linear_b": u(ks[9], (64,), 128),
        "out_w": u(ks[10], (10, 64), 64),          "out_b": u(ks[11], (10,), 64),
    }


# ------------------------------ forward pass -------------------------------

def convnet_forward(x, params):
    n = x.shape[0]
    assert x.shape[1:] == (1, IN_H, IN_W), "Convnet expects (N, 1, 28, 28) input"
    x2 = x.reshape(n, IN_H, IN_W).astype(jnp.float32)
    npad = pl.cdiv(n, BLOCK_B) * BLOCK_B
    if npad != n:
        x2 = jnp.pad(x2, ((0, npad - n), (0, 0), (0, 0)))

    w1e, w1o, b1 = _banded_conv_weights(params["conv1_w"], params["conv1_b"], IN_W)  # (140,72)x2
    w2e, w2o, b2 = _banded_conv_weights(params["conv2_w"], params["conv2_b"], 12)    # (360,64)x2
    wf, bf = _folded_tail(params)                                                     # (256,10)

    consts = (w1e, w1o, b1, w2e, w2o, b2, wf, bf)

    def const_spec(a):
        z = (0,) * a.ndim
        return pl.BlockSpec(a.shape, lambda i, _z=z: _z)

    out = pl.pallas_call(
        _lenet_kernel,
        out_shape=jax.ShapeDtypeStruct((npad, 10), jnp.float32),
        grid=(npad // BLOCK_B,),
        in_specs=[pl.BlockSpec((BLOCK_B, IN_H, IN_W), lambda i: (i, 0, 0))]
                 + [const_spec(a) for a in consts],
        out_specs=pl.BlockSpec((BLOCK_B, 10), lambda i: (i, 0)),
        compiler_params=pltpu.CompilerParams(
            dimension_semantics=("parallel",)),
    )(x2, *consts)
    return out[:n]


# ----------------------------- pure-JAX reference ---------------------------

def convnet_reference(x, params):
    dn = ("NCHW", "OIHW", "NCHW")
    y = jax.lax.conv_general_dilated(x, params["conv1_w"], (1, 1), "VALID",
                                     dimension_numbers=dn)
    y = y + params["conv1_b"].reshape(1, 6, 1, 1)
    y = jax.lax.reduce_window(y, -jnp.inf, jax.lax.max,
                              (1, 1, 2, 2), (1, 1, 2, 2), "VALID")
    y = jax.lax.conv_general_dilated(y, params["conv2_w"], (1, 1), "VALID",
                                     dimension_numbers=dn)
    y = y + params["conv2_b"].reshape(1, 16, 1, 1)
    y = jax.lax.reduce_window(y, -jnp.inf, jax.lax.max,
                              (1, 1, 2, 2), (1, 1, 2, 2), "VALID")
    y = jax.lax.conv_general_dilated(y, params["conv3_w"], (1, 1), "VALID",
                                     dimension_numbers=dn)
    y = y + params["conv3_b"].reshape(1, 120, 1, 1)
    y = y.reshape(y.shape[0], -1)
    y = y @ params["fc_w"].T + params["fc_b"]
    y = y @ params["linear_w"].T + params["linear_b"]
    y = y @ params["out_w"].T + params["out_b"]
    return y


if __name__ == "__main__":
    key = jax.random.PRNGKey(0)
    kx, kp = jax.random.split(key)
    # 16 images: 28x28 is required by the 120-dim flatten; 16 = 2 grid steps of
    # BLOCK_B=8 so the "parallel" axis can shard across both v7x TensorCores.
    x = jax.random.normal(kx, (16, 1, IN_H, IN_W), jnp.float32)
    params = init_params(kp)

    fwd = jax.jit(convnet_forward)
    y = jax.block_until_ready(fwd(x, params))
    assert y.shape == (16, 10) and y.dtype == jnp.float32

    y_ref = convnet_reference(x, params)
    assert float(jnp.max(jnp.abs(y - y_ref))) < 2e-2   # bf16 MXU-pass tolerance
    print("KERNEL_OK")
</pallas_src>

<mosaic_0001>
module attributes {stable_mosaic.version = 11 : i64} {
  func.func @_lenet_kernel(%arg0: i32, %arg1: memref<8x28x28xf32, #tpu.memory_space<vmem>>, %arg2: memref<140x72xf32, #tpu.memory_space<vmem>>, %arg3: memref<140x72xf32, #tpu.memory_space<vmem>>, %arg4: memref<1x72xf32, #tpu.memory_space<vmem>>, %arg5: memref<360x64xf32, #tpu.memory_space<vmem>>, %arg6: memref<360x64xf32, #tpu.memory_space<vmem>>, %arg7: memref<1x64xf32, #tpu.memory_space<vmem>>, %arg8: memref<256x10xf32, #tpu.memory_space<vmem>>, %arg9: memref<1x10xf32, #tpu.memory_space<vmem>>, %arg10: memref<8x10xf32, #tpu.memory_space<vmem>>) attributes {dimension_semantics = [#tpu.dimension_semantics<parallel>], iteration_bounds = array<i64: 2>, scalar_prefetch = 0 : i64, scratch_operands = 0 : i64, tpu.core_type = #tpu.core_type<tc>, window_params = [{transform_indices = @transform_0, window_bounds = array<i64: 8, 28, 28>}, {pipeline_mode = #tpu.pipeline_mode<synchronous>, transform_indices = @transform_1, window_bounds = array<i64: 140, 72>}, {pipeline_mode = #tpu.pipeline_mode<synchronous>, transform_indices = @transform_2, window_bounds = array<i64: 140, 72>}, {pipeline_mode = #tpu.pipeline_mode<synchronous>, transform_indices = @transform_3, window_bounds = array<i64: 1, 72>}, {pipeline_mode = #tpu.pipeline_mode<synchronous>, transform_indices = @transform_4, window_bounds = array<i64: 360, 64>}, {pipeline_mode = #tpu.pipeline_mode<synchronous>, transform_indices = @transform_5, window_bounds = array<i64: 360, 64>}, {pipeline_mode = #tpu.pipeline_mode<synchronous>, transform_indices = @transform_6, window_bounds = array<i64: 1, 64>}, {pipeline_mode = #tpu.pipeline_mode<synchronous>, transform_indices = @transform_7, window_bounds = array<i64: 256, 10>}, {pipeline_mode = #tpu.pipeline_mode<synchronous>, transform_indices = @transform_8, window_bounds = array<i64: 1, 10>}, {transform_indices = @transform_9, window_bounds = array<i64: 8, 10>}]} {
    %c0 = arith.constant 0 : index
    %c0_0 = arith.constant 0 : index
    %c0_1 = arith.constant 0 : index
    %0 = vector.load %arg1[%c0, %c0_0, %c0_1] : memref<8x28x28xf32, #tpu.memory_space<vmem>>, vector<8x28x28xf32>
    %1 = vector.extract_strided_slice %0 {offsets = [0, 0, 0], sizes = [8, 24, 28], strides = [1, 1, 1]} : vector<8x28x28xf32> to vector<8x24x28xf32>
    %2 = vector.extract_strided_slice %0 {offsets = [0, 1, 0], sizes = [8, 24, 28], strides = [1, 1, 1]} : vector<8x28x28xf32> to vector<8x24x28xf32>
    %3 = vector.extract_strided_slice %0 {offsets = [0, 2, 0], sizes = [8, 24, 28], strides = [1, 1, 1]} : vector<8x28x28xf32> to vector<8x24x28xf32>
    %4 = vector.extract_strided_slice %0 {offsets = [0, 3, 0], sizes = [8, 24, 28], strides = [1, 1, 1]} : vector<8x28x28xf32> to vector<8x24x28xf32>
    %5 = vector.extract_strided_slice %0 {offsets = [0, 4, 0], sizes = [8, 24, 28], strides = [1, 1, 1]} : vector<8x28x28xf32> to vector<8x24x28xf32>
    %6 = tpu.concatenate %1, %2, %3, %4, %5 in 2 : vector<8x24x28xf32>, vector<8x24x28xf32>, vector<8x24x28xf32>, vector<8x24x28xf32>, vector<8x24x28xf32> -> vector<8x24x140xf32>
    %7 = vector.shape_cast %6 : vector<8x24x140xf32> to vector<192x140xf32>
    %c0_2 = arith.constant 0 : index
    %c0_3 = arith.constant 0 : index
    %8 = vector.load %arg2[%c0_2, %c0_3] : memref<140x72xf32, #tpu.memory_space<vmem>>, vector<140x72xf32>
    %cst = arith.constant dense<0.000000e+00> : vector<192x72xf32>
    %9 = tpu.matmul %7, %8, %cst {dimension_numbers = #tpu.dot_dimension_numbers<[1], [0], [0], [1], [0, 0, 1, 1], [], []>} : vector<192x140xf32>, vector<140x72xf32>, vector<192x72xf32> -> vector<192x72xf32>
    %c0_4 = arith.constant 0 : index
    %c0_5 = arith.constant 0 : index
    %10 = vector.load %arg4[%c0_4, %c0_5] : memref<1x72xf32, #tpu.memory_space<vmem>>, vector<1x72xf32>
    %11 = vector.broadcast %10 : vector<1x72xf32> to vector<192x72xf32>
    %12 = arith.addf %9, %11 : vector<192x72xf32>
    %c0_6 = arith.constant 0 : index
    %c0_7 = arith.constant 0 : index
    %13 = vector.load %arg3[%c0_6, %c0_7] : memref<140x72xf32, #tpu.memory_space<vmem>>, vector<140x72xf32>
    %cst_8 = arith.constant dense<0.000000e+00> : vector<192x72xf32>
    %14 = tpu.matmul %7, %13, %cst_8 {dimension_numbers = #tpu.dot_dimension_numbers<[1], [0], [0], [1], [0, 0, 1, 1], [], []>} : vector<192x140xf32>, vector<140x72xf32>, vector<192x72xf32> -> vector<192x72xf32>
    %c0_9 = arith.constant 0 : index
    %c0_10 = arith.constant 0 : index
    %15 = vector.load %arg4[%c0_9, %c0_10] : memref<1x72xf32, #tpu.memory_space<vmem>>, vector<1x72xf32>
    %16 = vector.broadcast %15 : vector<1x72xf32> to vector<192x72xf32>
    %17 = arith.addf %14, %16 : vector<192x72xf32>
    %18 = arith.maximumf %12, %17 : vector<192x72xf32>
    %19 = vector.shape_cast %18 : vector<192x72xf32> to vector<96x2x72xf32>
    %20 = vector.extract_strided_slice %19 {offsets = [0, 0, 0], sizes = [96, 1, 72], strides = [1, 1, 1]} : vector<96x2x72xf32> to vector<96x1x72xf32>
    %21 = vector.shape_cast %20 : vector<96x1x72xf32> to vector<96x72xf32>
    %22 = vector.extract_strided_slice %19 {offsets = [0, 1, 0], sizes = [96, 1, 72], strides = [1, 1, 1]} : vector<96x2x72xf32> to vector<96x1x72xf32>
    %23 = vector.shape_cast %22 : vector<96x1x72xf32> to vector<96x72xf32>
    %24 = arith.maximumf %21, %23 : vector<96x72xf32>
    %25 = vector.shape_cast %24 : vector<96x72xf32> to vector<8x12x72xf32>
    %26 = vector.extract_strided_slice %25 {offsets = [0, 0, 0], sizes = [8, 8, 72], strides = [1, 1, 1]} : vector<8x12x72xf32> to vector<8x8x72xf32>
    %27 = vector.extract_strided_slice %25 {offsets = [0, 1, 0], sizes = [8, 8, 72], strides = [1, 1, 1]} : vector<8x12x72xf32> to vector<8x8x72xf32>
    %28 = vector.extract_strided_slice %25 {offsets = [0, 2, 0], sizes = [8, 8, 72], strides = [1, 1, 1]} : vector<8x12x72xf32> to vector<8x8x72xf32>
    %29 = vector.extract_strided_slice %25 {offsets = [0, 3, 0], sizes = [8, 8, 72], strides = [1, 1, 1]} : vector<8x12x72xf32> to vector<8x8x72xf32>
    %30 = vector.extract_strided_slice %25 {offsets = [0, 4, 0], sizes = [8, 8, 72], strides = [1, 1, 1]} : vector<8x12x72xf32> to vector<8x8x72xf32>
    %31 = tpu.concatenate %26, %27, %28, %29, %30 in 2 : vector<8x8x72xf32>, vector<8x8x72xf32>, vector<8x8x72xf32>, vector<8x8x72xf32>, vector<8x8x72xf32> -> vector<8x8x360xf32>
    %32 = vector.shape_cast %31 : vector<8x8x360xf32> to vector<64x360xf32>
    %c0_11 = arith.constant 0 : index
    %c0_12 = arith.constant 0 : index
    %33 = vector.load %arg5[%c0_11, %c0_12] : memref<360x64xf32, #tpu.memory_space<vmem>>, vector<360x64xf32>
    %cst_13 = arith.constant dense<0.000000e+00> : vector<64x64xf32>
    %34 = tpu.matmul %32, %33, %cst_13 {dimension_numbers = #tpu.dot_dimension_numbers<[1], [0], [0], [1], [0, 0, 1, 1], [], []>} : vector<64x360xf32>, vector<360x64xf32>, vector<64x64xf32> -> vector<64x64xf32>
    %c0_14 = arith.constant 0 : index
    %c0_15 = arith.constant 0 : index
    %35 = vector.load %arg7[%c0_14, %c0_15] : memref<1x64xf32, #tpu.memory_space<vmem>>, vector<1x64xf32>
    %36 = vector.broadcast %35 : vector<1x64xf32> to vector<64x64xf32>
    %37 = arith.addf %34, %36 : vector<64x64xf32>
    %c0_16 = arith.constant 0 : index
    %c0_17 = arith.constant 0 : index
    %38 = vector.load %arg6[%c0_16, %c0_17] : memref<360x64xf32, #tpu.memory_space<vmem>>, vector<360x64xf32>
    %cst_18 = arith.constant dense<0.000000e+00> : vector<64x64xf32>
    %39 = tpu.matmul %32, %38, %cst_18 {dimension_numbers = #tpu.dot_dimension_numbers<[1], [0], [0], [1], [0, 0, 1, 1], [], []>} : vector<64x360xf32>, vector<360x64xf32>, vector<64x64xf32> -> vector<64x64xf32>
    %c0_19 = arith.constant 0 : index
    %c0_20 = arith.constant 0 : index
    %40 = vector.load %arg7[%c0_19, %c0_20] : memref<1x64xf32, #tpu.memory_space<vmem>>, vector<1x64xf32>
    %41 = vector.broadcast %40 : vector<1x64xf32> to vector<64x64xf32>
    %42 = arith.addf %39, %41 : vector<64x64xf32>
    %43 = arith.maximumf %37, %42 : vector<64x64xf32>
    %44 = vector.shape_cast %43 : vector<64x64xf32> to vector<32x2x64xf32>
    %45 = vector.extract_strided_slice %44 {offsets = [0, 0, 0], sizes = [32, 1, 64], strides = [1, 1, 1]} : vector<32x2x64xf32> to vector<32x1x64xf32>
    %46 = vector.shape_cast %45 : vector<32x1x64xf32> to vector<32x64xf32>
    %47 = vector.extract_strided_slice %44 {offsets = [0, 1, 0], sizes = [32, 1, 64], strides = [1, 1, 1]} : vector<32x2x64xf32> to vector<32x1x64xf32>
    %48 = vector.shape_cast %47 : vector<32x1x64xf32> to vector<32x64xf32>
    %49 = arith.maximumf %46, %48 : vector<32x64xf32>
    %50 = vector.shape_cast %49 : vector<32x64xf32> to vector<8x4x64xf32>
    %cst_21 = arith.constant 0.000000e+00 : f32
    %51 = vector.broadcast %cst_21 : f32 to vector<8x10xf32>
    %c0_22 = arith.constant 0 : index
    %c0_23 = arith.constant 0 : index
    %52 = vector.load %arg9[%c0_22, %c0_23] : memref<1x10xf32, #tpu.memory_space<vmem>>, vector<1x10xf32>
    %53 = vector.broadcast %52 : vector<1x10xf32> to vector<8x10xf32>
    %54 = arith.addf %51, %53 : vector<8x10xf32>
    %55 = vector.extract_strided_slice %50 {offsets = [0, 0, 0], sizes = [8, 1, 64], strides = [1, 1, 1]} : vector<8x4x64xf32> to vector<8x1x64xf32>
    %56 = vector.shape_cast %55 : vector<8x1x64xf32> to vector<8x64xf32>
    %c0_24 = arith.constant 0 : index
    %c0_25 = arith.constant 0 : index
    %57 = vector.load %arg8[%c0_24, %c0_25] : memref<256x10xf32, #tpu.memory_space<vmem>>, vector<64x10xf32>
    %cst_26 = arith.constant dense<0.000000e+00> : vector<8x10xf32>
    %58 = tpu.matmul %56, %57, %cst_26 {dimension_numbers = #tpu.dot_dimension_numbers<[1], [0], [0], [1], [0, 0, 1, 1], [], []>} : vector<8x64xf32>, vector<64x10xf32>, vector<8x10xf32> -> vector<8x10xf32>
    %59 = arith.addf %54, %58 : vector<8x10xf32>
    %60 = vector.extract_strided_slice %50 {offsets = [0, 1, 0], sizes = [8, 1, 64], strides = [1, 1, 1]} : vector<8x4x64xf32> to vector<8x1x64xf32>
    %61 = vector.shape_cast %60 : vector<8x1x64xf32> to vector<8x64xf32>
    %c64 = arith.constant 64 : index
    %c0_27 = arith.constant 0 : index
    %62 = vector.load %arg8[%c64, %c0_27] : memref<256x10xf32, #tpu.memory_space<vmem>>, vector<64x10xf32>
    %cst_28 = arith.constant dense<0.000000e+00> : vector<8x10xf32>
    %63 = tpu.matmul %61, %62, %cst_28 {dimension_numbers = #tpu.dot_dimension_numbers<[1], [0], [0], [1], [0, 0, 1, 1], [], []>} : vector<8x64xf32>, vector<64x10xf32>, vector<8x10xf32> -> vector<8x10xf32>
    %64 = arith.addf %59, %63 : vector<8x10xf32>
    %65 = vector.extract_strided_slice %50 {offsets = [0, 2, 0], sizes = [8, 1, 64], strides = [1, 1, 1]} : vector<8x4x64xf32> to vector<8x1x64xf32>
    %66 = vector.shape_cast %65 : vector<8x1x64xf32> to vector<8x64xf32>
    %c128 = arith.constant 128 : index
    %c0_29 = arith.constant 0 : index
    %67 = vector.load %arg8[%c128, %c0_29] : memref<256x10xf32, #tpu.memory_space<vmem>>, vector<64x10xf32>
    %cst_30 = arith.constant dense<0.000000e+00> : vector<8x10xf32>
    %68 = tpu.matmul %66, %67, %cst_30 {dimension_numbers = #tpu.dot_dimension_numbers<[1], [0], [0], [1], [0, 0, 1, 1], [], []>} : vector<8x64xf32>, vector<64x10xf32>, vector<8x10xf32> -> vector<8x10xf32>
    %69 = arith.addf %64, %68 : vector<8x10xf32>
    %70 = vector.extract_strided_slice %50 {offsets = [0, 3, 0], sizes = [8, 1, 64], strides = [1, 1, 1]} : vector<8x4x64xf32> to vector<8x1x64xf32>
    %71 = vector.shape_cast %70 : vector<8x1x64xf32> to vector<8x64xf32>
    %c192 = arith.constant 192 : index
    %c0_31 = arith.constant 0 : index
    %72 = vector.load %arg8[%c192, %c0_31] : memref<256x10xf32, #tpu.memory_space<vmem>>, vector<64x10xf32>
    %cst_32 = arith.constant dense<0.000000e+00> : vector<8x10xf32>
    %73 = tpu.matmul %71, %72, %cst_32 {dimension_numbers = #tpu.dot_dimension_numbers<[1], [0], [0], [1], [0, 0, 1, 1], [], []>} : vector<8x64xf32>, vector<64x10xf32>, vector<8x10xf32> -> vector<8x10xf32>
    %74 = arith.addf %69, %73 : vector<8x10xf32>
    %c0_33 = arith.constant 0 : index
    %c0_34 = arith.constant 0 : index
    %75 = vector.load %arg10[%c0_33, %c0_34] : memref<8x10xf32, #tpu.memory_space<vmem>>, vector<8x10xf32>
    tpu.vector_store %arg10[%c0_33, %c0_34], %74 {strides = array<i32>} : memref<8x10xf32, #tpu.memory_space<vmem>>, vector<8x10xf32>,
    return
  }
  func.func @transform_0(%arg0: i32) -> (i32, i32, i32) {
    %c0_i32 = arith.constant 0 : i32
    %c0_i32_0 = arith.constant 0 : i32
    %c0_i32_1 = arith.constant 0 : i32
    return %arg0, %c0_i32, %c0_i32_0 : i32, i32, i32
  }
  func.func @transform_1(%arg0: i32) -> (i32, i32) {
    %c0_i32 = arith.constant 0 : i32
    %c0_i32_0 = arith.constant 0 : i32
    %c0_i32_1 = arith.constant 0 : i32
    return %c0_i32, %c0_i32_0 : i32, i32
  }
  func.func @transform_2(%arg0: i32) -> (i32, i32) {
    %c0_i32 = arith.constant 0 : i32
    %c0_i32_0 = arith.constant 0 : i32
    %c0_i32_1 = arith.constant 0 : i32
    return %c0_i32, %c0_i32_0 : i32, i32
  }
  func.func @transform_3(%arg0: i32) -> (i32, i32) {
    %c0_i32 = arith.constant 0 : i32
    %c0_i32_0 = arith.constant 0 : i32
    %c0_i32_1 = arith.constant 0 : i32
    return %c0_i32, %c0_i32_0 : i32, i32
  }
  func.func @transform_4(%arg0: i32) -> (i32, i32) {
    %c0_i32 = arith.constant 0 : i32
    %c0_i32_0 = arith.constant 0 : i32
    %c0_i32_1 = arith.constant 0 : i32
    return %c0_i32, %c0_i32_0 : i32, i32
  }
  func.func @transform_5(%arg0: i32) -> (i32, i32) {
    %c0_i32 = arith.constant 0 : i32
    %c0_i32_0 = arith.constant 0 : i32
    %c0_i32_1 = arith.constant 0 : i32
    return %c0_i32, %c0_i32_0 : i32, i32
  }
  func.func @transform_6(%arg0: i32) -> (i32, i32) {
    %c0_i32 = arith.constant 0 : i32
    %c0_i32_0 = arith.constant 0 : i32
    %c0_i32_1 = arith.constant 0 : i32
    return %c0_i32, %c0_i32_0 : i32, i32
  }
  func.func @transform_7(%arg0: i32) -> (i32, i32) {
    %c0_i32 = arith.constant 0 : i32
    %c0_i32_0 = arith.constant 0 : i32
    %c0_i32_1 = arith.constant 0 : i32
    return %c0_i32, %c0_i32_0 : i32, i32
  }
  func.func @transform_8(%arg0: i32) -> (i32, i32) {
    %c0_i32 = arith.constant 0 : i32
    %c0_i32_0 = arith.constant 0 : i32
    %c0_i32_1 = arith.constant 0 : i32
    return %c0_i32, %c0_i32_0 : i32, i32
  }
  func.func @transform_9(%arg0: i32) -> (i32, i32) {
    %c0_i32 = arith.constant 0 : i32
    %c0_i32_0 = arith.constant 0 : i32
    return %arg0, %c0_i32 : i32, i32
  }
}

</mosaic_0001>

<llo_original>
// kernel: convnet_forward.1
$region0: #{convnet_forward.1}
  #allocation0 [shape = 'u32[]', space=smem, size = 0x4, offset = 0x4, fixed_abs, tag = 'smem constant byte address 0x4 - core index']
  #allocation1 [shape = 'u32[72,128]{1,0:T(1,128)}', space=vmem, size = 0x9000, scoped, tag = 'internal scratch']
  %s0 = inlined_call_operand.vmem [shape: f32[16,28,28], index: 0, kind: input, shape index: {}]
  %s1 = inlined_call_operand.vmem [shape: f32[140,72], index: 1, kind: input, shape index: {}]
  %s2 = inlined_call_operand.vmem [shape: f32[140,72], index: 2, kind: input, shape index: {}]
  %s3 = inlined_call_operand.vmem [shape: f32[1,72], index: 3, kind: input, shape index: {}]
  %s4 = inlined_call_operand.vmem [shape: f32[360,64], index: 4, kind: input, shape index: {}]
  %s5 = inlined_call_operand.vmem [shape: f32[360,64], index: 5, kind: input, shape index: {}]
  %s6 = inlined_call_operand.vmem [shape: f32[1,64], index: 6, kind: input, shape index: {}]
  %s7 = inlined_call_operand.vmem [shape: f32[256,10], index: 7, kind: input, shape index: {}]
  %s8 = inlined_call_operand.vmem [shape: f32[1,10], index: 8, kind: input, shape index: {}]
  %s9 = inlined_call_operand.hbm [shape: f32[16,10], index: 9, kind: output, shape index: {}]
  %s10 = sld [smem:[#allocation0]]
  $region69: #{convnet_forward.1} parent=0
    _
  %s12 = ssub.s32 1, %s10
  %s13 = scalar_select 0, %s12, %s10
  $region1: #{convnet_forward.1} parent=0
    #allocation2 [shape = 'u8[8192]{0}', space=vmem, size = 0x2000, scoped, tag = 'output window, operand 0']
    #allocation3 [shape = 's32[2]{0}', space=sflag, size = 0x8, scoped, tag = 'scoped memory for convnet_forward.1']
    %14 = vsyncpa [#allocation3], 0
    %s15 = scalar_lea.sflag [#allocation3], 1
    %16 = vsyncpa %s15, 0
    loop: start=0, step=1, limit=4
    $region2: #{convnet_forward.1} parent=1 // loop_pre_header
      _
    $region3: #{convnet_forward.1} parent=1 // loop_header
      %s18 = sphi 0, %s22
      %p19 = scmp.ge.s32.totalorder %s18, 4
      %s28 = sphi 0, %s30
      %s31 = sphi 0, %s28
      %s32 = sphi 0, %s31
      %s48 = sphi 0, %s32
      %s52 = sphi 0, %s52
      %s54 = sphi 0, %s52
      %s55 = sphi 0, %s54
      %s69 = sphi 0, %s55
      %s73 = sphi 0, %s73
      %s75 = sphi 0, %s73
      %s76 = sphi 0, %s75
      %s90 = sphi 0, %s76
      %s94 = sphi 0, %s94
      %s96 = sphi 0, %s94
      %s97 = sphi 0, %s96
      %s111 = sphi 0, %s97
      %s115 = sphi 0, %s115
      %s117 = sphi 0, %s115
      %s118 = sphi 0, %s117
      %s132 = sphi 0, %s118
      %s136 = sphi 0, %s136
      %s138 = sphi 0, %s136
      %s139 = sphi 0, %s138
      %s153 = sphi 0, %s139
      %s157 = sphi 0, %s157
      %s159 = sphi 0, %s157
      %s160 = sphi 0, %s159
      %s174 = sphi 0, %s160
      %s178 = sphi 0, %s178
      %s180 = sphi 0, %s178
      %s181 = sphi 0, %s180
      %s195 = sphi 0, %s181
      %s199 = sphi 0, %s199
      %s201 = sphi 0, %s199
      %s202 = sphi 0, %s201
      %s216 = sphi 0, %s202
      %s222 = sphi 0, %s224
      %s225 = sphi 0, %s222
      %s226 = sphi 0, %s225
      %s242 = sphi 0, %s226
    $region4: #{convnet_forward.1} parent=1 // loop_header_branch
      %21 = sbr.rel (%p19) target = $region8
    $region5: #{convnet_forward.1} parent=1 // loop_body
      %s23 = ssub.s32 %s18, 1
      %s24 = ssub.s32 %s18, 2
      %s25 = sadd.s32 %s18, 1
      %s26 = ssub.s32 %s18, %s25
      %p27 = scmp.eq.s32.totalorder %s26, 0
      %s29 = sadd.s32 %s28, 1
      %s30 = scalar_select %p27, %s28, %s29
      %p33 = pneg %p27
      %p34 = scmp.eq.s32.totalorder %s18, 1
      %p35 = por %p33, %p34
      %p36 = scmp.ne.s32.totalorder %s28, %s31
      %p37 = scmp.eq.s32.totalorder %s18, 0
      %p38 = por %p36, %p37
      %p39 = scmp.ne.s32.totalorder %s28, %s31
      %p40 = scmp.eq.s32.totalorder %s23, 1
      %p41 = por %p39, %p40
      %p42 = scmp.ne.s32.totalorder %s31, %s32
      %p43 = scmp.eq.s32.totalorder %s23, 0
      %p44 = por %p42, %p43
      %p45 = scmp.ne.s32.totalorder %s31, %s32
      %p46 = scmp.eq.s32.totalorder %s24, 1
      %p47 = por %p45, %p46
      %p49 = scmp.ne.s32.totalorder %s32, %s48
      %p50 = scmp.eq.s32.totalorder %s24, 0
      %p51 = por %p49, %p50
      %s53 = sadd.s32 %s52, 1
      %p56 = scmp.eq.s32.totalorder %s18, 1
      %p57 = scmp.ne.s32.totalorder %s52, %s54
      %p58 = scmp.eq.s32.totalorder %s18, 0
      %p59 = por %p57, %p58
      %p60 = scmp.ne.s32.totalorder %s52, %s54
      %p61 = scmp.eq.s32.totalorder %s23, 1
      %p62 = por %p60, %p61
      %p63 = scmp.ne.s32.totalorder %s54, %s55
      %p64 = scmp.eq.s32.totalorder %s23, 0
      %p65 = por %p63, %p64
      %p66 = scmp.ne.s32.totalorder %s54, %s55
      %p67 = scmp.eq.s32.totalorder %s24, 1
      %p68 = por %p66, %p67
      %p70 = scmp.ne.s32.totalorder %s55, %s69
      %p71 = scmp.eq.s32.totalorder %s24, 0
      %p72 = por %p70, %p71
      %s74 = sadd.s32 %s73, 1
      %p77 = scmp.eq.s32.totalorder %s18, 1
      %p78 = scmp.ne.s32.totalorder %s73, %s75
      %p79 = scmp.eq.s32.totalorder %s18, 0
      %p80 = por %p78, %p79
      %p81 = scmp.ne.s32.totalorder %s73, %s75
      %p82 = scmp.eq.s32.totalorder %s23, 1
      %p83 = por %p81, %p82
      %p84 = scmp.ne.s32.totalorder %s75, %s76
      %p85 = scmp.eq.s32.totalorder %s23, 0
      %p86 = por %p84, %p85
      %p87 = scmp.ne.s32.totalorder %s75, %s76
      %p88 = scmp.eq.s32.totalorder %s24, 1
      %p89 = por %p87, %p88
      %p91 = scmp.ne.s32.totalorder %s76, %s90
      %p92 = scmp.eq.s32.totalorder %s24, 0
      %p93 = por %p91, %p92
      %s95 = sadd.s32 %s94, 1
      %p98 = scmp.eq.s32.totalorder %s18, 1
      %p99 = scmp.ne.s32.totalorder %s94, %s96
      %p100 = scmp.eq.s32.totalorder %s18, 0
      %p101 = por %p99, %p100
      %p102 = scmp.ne.s32.totalorder %s94, %s96
      %p103 = scmp.eq.s32.totalorder %s23, 1
      %p104 = por %p102, %p103
      %p105 = scmp.ne.s32.totalorder %s96, %s97
      %p106 = scmp.eq.s32.totalorder %s23, 0
      %p107 = por %p105, %p106
      %p108 = scmp.ne.s32.totalorder %s96, %s97
      %p109 = scmp.eq.s32.totalorder %s24, 1
      %p110 = por %p108, %p109
      %p112 = scmp.ne.s32.totalorder %s97, %s111
      %p113 = scmp.eq.s32.totalorder %s24, 0
      %p114 = por %p112, %p113
      %s116 = sadd.s32 %s115, 1
      %p119 = scmp.eq.s32.totalorder %s18, 1
      %p120 = scmp.ne.s32.totalorder %s115, %s117
      %p121 = scmp.eq.s32.totalorder %s18, 0
      %p122 = por %p120, %p121
      %p123 = scmp.ne.s32.totalorder %s115, %s117
      %p124 = scmp.eq.s32.totalorder %s23, 1
      %p125 = por %p123, %p124
      %p126 = scmp.ne.s32.totalorder %s117, %s118
      %p127 = scmp.eq.s32.totalorder %s23, 0
      %p128 = por %p126, %p127
      %p129 = scmp.ne.s32.totalorder %s117, %s118
      %p130 = scmp.eq.s32.totalorder %s24, 1
      %p131 = por %p129, %p130
      %p133 = scmp.ne.s32.totalorder %s118, %s132
      %p134 = scmp.eq.s32.totalorder %s24, 0
      %p135 = por %p133, %p134
      %s137 = sadd.s32 %s136, 1
      %p140 = scmp.eq.s32.totalorder %s18, 1
      %p141 = scmp.ne.s32.totalorder %s136, %s138
      %p142 = scmp.eq.s32.totalorder %s18, 0
      %p143 = por %p141, %p142
      %p144 = scmp.ne.s32.totalorder %s136, %s138
      %p145 = scmp.eq.s32.totalorder %s23, 1
      %p146 = por %p144, %p145
      %p147 = scmp.ne.s32.totalorder %s138, %s139
      %p148 = scmp.eq.s32.totalorder %s23, 0
      %p149 = por %p147, %p148
      %p150 = scmp.ne.s32.totalorder %s138, %s139
      %p151 = scmp.eq.s32.totalorder %s24, 1
      %p152 = por %p150, %p151
      %p154 = scmp.ne.s32.totalorder %s139, %s153
      %p155 = scmp.eq.s32.totalorder %s24, 0
      %p156 = por %p154, %p155
      %s158 = sadd.s32 %s157, 1
      %p161 = scmp.eq.s32.totalorder %s18, 1
      %p162 = scmp.ne.s32.totalorder %s157, %s159
      %p163 = scmp.eq.s32.totalorder %s18, 0
      %p164 = por %p162, %p163
      %p165 = scmp.ne.s32.totalorder %s157, %s159
      %p166 = scmp.eq.s32.totalorder %s23, 1
      %p167 = por %p165, %p166
      %p168 = scmp.ne.s32.totalorder %s159, %s160
      %p169 = scmp.eq.s32.totalorder %s23, 0
      %p170 = por %p168, %p169
      %p171 = scmp.ne.s32.totalorder %s159, %s160
      %p172 = scmp.eq.s32.totalorder %s24, 1
      %p173 = por %p171, %p172
      %p175 = scmp.ne.s32.totalorder %s160, %s174
      %p176 = scmp.eq.s32.totalorder %s24, 0
      %p177 = por %p175, %p176
      %s179 = sadd.s32 %s178, 1
      %p182 = scmp.eq.s32.totalorder %s18, 1
      %p183 = scmp.ne.s32.totalorder %s178, %s180
      %p184 = scmp.eq.s32.totalorder %s18, 0
      %p185 = por %p183, %p184
      %p186 = scmp.ne.s32.totalorder %s178, %s180
      %p187 = scmp.eq.s32.totalorder %s23, 1
      %p188 = por %p186, %p187
      %p189 = scmp.ne.s32.totalorder %s180, %s181
      %p190 = scmp.eq.s32.totalorder %s23, 0
      %p191 = por %p189, %p190
      %p192 = scmp.ne.s32.totalorder %s180, %s181
      %p193 = scmp.eq.s32.totalorder %s24, 1
      %p194 = por %p192, %p193
      %p196 = scmp.ne.s32.totalorder %s181, %s195
      %p197 = scmp.eq.s32.totalorder %s24, 0
      %p198 = por %p196, %p197
      %s200 = sadd.s32 %s199, 1
      %p203 = scmp.eq.s32.totalorder %s18, 1
      %p204 = scmp.ne.s32.totalorder %s199, %s201
      %p205 = scmp.eq.s32.totalorder %s18, 0
      %p206 = por %p204, %p205
      %p207 = scmp.ne.s32.totalorder %s199, %s201
      %p208 = scmp.eq.s32.totalorder %s23, 1
      %p209 = por %p207, %p208
      %p210 = scmp.ne.s32.totalorder %s201, %s202
      %p211 = scmp.eq.s32.totalorder %s23, 0
      %p212 = por %p210, %p211
      %p213 = scmp.ne.s32.totalorder %s201, %s202
      %p214 = scmp.eq.s32.totalorder %s24, 1
      %p215 = por %p213, %p214
      %p217 = scmp.ne.s32.totalorder %s202, %s216
      %p218 = scmp.eq.s32.totalorder %s24, 0
      %p219 = por %p217, %p218
      %s220 = ssub.s32 %s18, %s25
      %p221 = scmp.eq.s32.totalorder %s220, 0
      %s223 = sadd.s32 %s222, 1
      %s224 = scalar_select %p221, %s222, %s223
      %p227 = pneg %p221
      %p228 = scmp.eq.s32.totalorder %s18, 1
      %p229 = por %p227, %p228
      %p230 = scmp.ne.s32.totalorder %s222, %s225
      %p231 = scmp.eq.s32.totalorder %s18, 0
      %p232 = por %p230, %p231
      %p233 = scmp.ne.s32.totalorder %s222, %s225
      %p234 = scmp.eq.s32.totalorder %s23, 1
      %p235 = por %p233, %p234
      %p236 = scmp.ne.s32.totalorder %s225, %s226
      %p237 = scmp.eq.s32.totalorder %s23, 0
      %p238 = por %p236, %p237
      %p239 = scmp.ne.s32.totalorder %s225, %s226
      %p240 = scmp.eq.s32.totalorder %s24, 1
      %p241 = por %p239, %p240
      %p243 = scmp.ne.s32.totalorder %s226, %s242
      %p244 = scmp.eq.s32.totalorder %s24, 0
      %p245 = por %p243, %p244
      %p246 = scmp.le.s32.totalorder 1, %s18
      %p247 = scmp.lt.s32.totalorder %s18, 3
      %p248 = pnand %p246, %p247
      %p249 = pneg %p248
      // Predicated region
      $region9: #{convnet_forward.1} parent=5 // pred_check
        _
      $region10: #{convnet_forward.1} parent=5 // pred_check_branch
        %251 = sbr.rel (%p248) target = $region12
      $region11: #{convnet_forward.1} parent=5 // pred_region
        %s252 = ssub.s32 %s18, 1
        // Predicated region
        $region13: #{convnet_forward.1} parent=11 // pred_check
          %p253 = pneg %p65
        $region14: #{convnet_forward.1} parent=11 // pred_check_branch
          %255 = sbr.rel (%p253) target = $region16
        $region15: #{convnet_forward.1} parent=11 // pred_region
          _
        $region16: #{convnet_forward.1} parent=11 // pred_fallthru
          _
        // Predicated region
        $region17: #{convnet_forward.1} parent=11 // pred_check
          %p256 = pneg %p86
        $region18: #{convnet_forward.1} parent=11 // pred_check_branch
          %258 = sbr.rel (%p256) target = $region20
        $region19: #{convnet_forward.1} parent=11 // pred_region
          _
        $region20: #{convnet_forward.1} parent=11 // pred_fallthru
          _
        // Predicated region
        $region21: #{convnet_forward.1} parent=11 // pred_check
          %p259 = pneg %p107
        $region22: #{convnet_forward.1} parent=11 // pred_check_branch
          %261 = sbr.rel (%p259) target = $region24
        $region23: #{convnet_forward.1} parent=11 // pred_region
          _
        $region24: #{convnet_forward.1} parent=11 // pred_fallthru
          _
        // Predicated region
        $region25: #{convnet_forward.1} parent=11 // pred_check
          %p262 = pneg %p128
        $region26: #{convnet_forward.1} parent=11 // pred_check_branch
          %264 = sbr.rel (%p262) target = $region28
        $region27: #{convnet_forward.1} parent=11 // pred_region
          _
        $region28: #{convnet_forward.1} parent=11 // pred_fallthru
          _
        // Predicated region
        $region29: #{convnet_forward.1} parent=11 // pred_check
          %p265 = pneg %p149
        $region30: #{convnet_forward.1} parent=11 // pred_check_branch
          %267 = sbr.rel (%p265) target = $region32
        $region31: #{convnet_forward.1} parent=11 // pred_region
          _
        $region32: #{convnet_forward.1} parent=11 // pred_fallthru
          _
        // Predicated region
        $region33: #{convnet_forward.1} parent=11 // pred_check
          %p268 = pneg %p170
        $region34: #{convnet_forward.1} parent=11 // pred_check_branch
          %270 = sbr.rel (%p268) target = $region36
        $region35: #{convnet_forward.1} parent=11 // pred_region
          _
        $region36: #{convnet_forward.1} parent=11 // pred_fallthru
          _
        // Predicated region
        $region37: #{convnet_forward.1} parent=11 // pred_check
          %p271 = pneg %p191
        $region38: #{convnet_forward.1} parent=11 // pred_check_branch
          %273 = sbr.rel (%p271) target = $region40
        $region39: #{convnet_forward.1} parent=11 // pred_region
          _
        $region40: #{convnet_forward.1} parent=11 // pred_fallthru
          _
        // Predicated region
        $region41: #{convnet_forward.1} parent=11 // pred_check
          %p274 = pneg %p212
        $region42: #{convnet_forward.1} parent=11 // pred_check_branch
          %276 = sbr.rel (%p274) target = $region44
        $region43: #{convnet_forward.1} parent=11 // pred_region
          _
        $region44: #{convnet_forward.1} parent=11 // pred_fallthru
          _
      $region12: #{convnet_forward.1} parent=5 // pred_fallthru
        _
      %p277 = scmp.lt.s32.totalorder %s18, 2
      // Predicated region
      $region45: #{convnet_forward.1} parent=5 // pred_check
        %p278 = pneg %p277
      $region46: #{convnet_forward.1} parent=5 // pred_check_branch
        %280 = sbr.rel (%p278) target = $region48
      $region47: #{convnet_forward.1} parent=5 // pred_region
        // Predicated region
        $region49: #{convnet_forward.1} parent=47 // pred_check
          %p281 = pneg %p38
        $region50: #{convnet_forward.1} parent=47 // pred_check_branch
          %283 = sbr.rel (%p281) target = $region52
        $region51: #{convnet_forward.1} parent=47 // pred_region
          %s284 = smul.u32 8, %s18
          %p285 = scmp.lt.s32.totalorder %s284, 15
          %s286 = scalar_select %p285, %s284, 15
          %s287 = smul.addr %s286, 4
          %s288 = smul.addr %s287, 8
          %s289 = scalar_lea.vmem %s0, %s288
          %s290 = smul.u32 8, %s18
        $region52: #{convnet_forward.1} parent=47 // pred_fallthru
          _
      $region48: #{convnet_forward.1} parent=5 // pred_fallthru
        _
      %p291 = scmp.le.s32.totalorder 1, %s18
      %p292 = scmp.lt.s32.totalorder %s18, 3
      %p293 = pnand %p291, %p292
      %p294 = pneg %p293
      // Predicated region
      $region53: #{convnet_forward.1} parent=5 // pred_check
        _
      $region54: #{convnet_forward.1} parent=5 // pred_check_branch
        %296 = sbr.rel (%p293) target = $region56
      $region55: #{convnet_forward.1} parent=5 // pred_region
        %s297 = ssub.s32 %s18, 1
        %s298 = smul.u32 8, %s23
        %p299 = scmp.lt.s32.totalorder %s298, 15
        %s300 = scalar_select %p299, %s298, 15
        %s301 = smul.addr %s300, 4
        %s302 = smul.addr %s301, 8
        %s303 = scalar_lea.vmem %s0, %s302
        %p304 = pneg %p44
        %p305 = pneg %p41
        %p306 = pneg %p65
        %p307 = pneg %p62
        %p308 = pneg %p86
        %p309 = pneg %p83
        %p310 = pneg %p107
        %p311 = pneg %p104
        %p312 = pneg %p128
        %p313 = pneg %p125
        %p314 = pneg %p149
        %p315 = pneg %p146
        %p316 = pneg %p170
        %p317 = pneg %p167
        %p318 = pneg %p191
        %p319 = pneg %p188
        %p320 = pneg %p212
        %p321 = pneg %p209
        %p322 = pneg %p238
        %p323 = pneg %p235
        %s324 = sand.u32 %s225, 1
        %s325 = scalar_lea.sflag [#allocation3], %s324
        %s326 = sand.u32 %s225, 1
        %s327 = smul.addr %s326, 8
        %s328 = scalar_lea.vmem [#allocation2], %s327
        %s329 = smul.u32 8, %s23
        %p330 = scmp.lt.s32.totalorder %s329, 15
        %s331 = scalar_select %p330, %s329, 15
        %s332 = smul.addr %s331, 4
        %s333 = smul.addr %s332, 8
        %s334 = scalar_lea.vmem %s0, %s333
        %s335 = smul.u32 8, %s23
        %v336 = vld [vmem:[%s334] sm:$0xff]
        %v337 = vld [vmem:[%s334 + $0x8] sm:$0xff]
        %v338 = vld [vmem:[%s334 + $0x10] sm:$0xff]
        %v339 = vld [vmem:[%s334 + $0x18] sm:$0xf]
        %v340 = vld [vmem:[%s334 + $0x20] sm:$0xff]
        %v341 = vld [vmem:[%s334 + $0x28] sm:$0xff]
        %v342 = vld [vmem:[%s334 + $0x30] sm:$0xff]
        %v343 = vld [vmem:[%s334 + $0x38] sm:$0xf]
        %v344 = vld [vmem:[%s334 + $0x40] sm:$0xff]
        %v345 = vld [vmem:[%s334 + $0x48] sm:$0xff]
        %v346 = vld [vmem:[%s334 + $0x50] sm:$0xff]
        %v347 = vld [vmem:[%s334 + $0x58] sm:$0xf]
        %v348 = vld [vmem:[%s334 + $0x60] sm:$0xff]
        %v349 = vld [vmem:[%s334 + $0x68] sm:$0xff]
        %v350 = vld [vmem:[%s334 + $0x70] sm:$0xff]
        %v351 = vld [vmem:[%s334 + $0x78] sm:$0xf]
        %v352 = vld [vmem:[%s334 + $0x80] sm:$0xff]
        %v353 = vld [vmem:[%s334 + $0x88] sm:$0xff]
        %v354 = vld [vmem:[%s334 + $0x90] sm:$0xff]
        %v355 = vld [vmem:[%s334 + $0x98] sm:$0xf]
        %v356 = vld [vmem:[%s334 + $0xa0] sm:$0xff]
        %v357 = vld [vmem:[%s334 + $0xa8] sm:$0xff]
        %v358 = vld [vmem:[%s334 + $0xb0] sm:$0xff]
        %v359 = vld [vmem:[%s334 + $0xb8] sm:$0xf]
        %v360 = vld [vmem:[%s334 + $0xc0] sm:$0xff]
        %v361 = vld [vmem:[%s334 + $0xc8] sm:$0xff]
        %v362 = vld [vmem:[%s334 + $0xd0] sm:$0xff]
        %v363 = vld [vmem:[%s334 + $0xd8] sm:$0xf]
        %v364 = vld [vmem:[%s334 + $0xe0] sm:$0xff]
        %v365 = vld [vmem:[%s334 + $0xe8] sm:$0xff]
        %v366 = vld [vmem:[%s334 + $0xf0] sm:$0xff]
        %v367 = vld [vmem:[%s334 + $0xf8] sm:$0xf]
        %vm400 = vcmask 1046528
        %v401 = vrot.slane %v336, 1
        %v402 = vrot.slane %v337, 1
        %v403 = vsel %vm400, %v401, %v402
        %v404 = vrot.slane %v338, 1
        %v405 = vsel %vm400, %v402, %v404
        %v406 = vrot.slane %v339, 1
        %v407 = vsel %vm400, %v404, %v406
        %v408 = vrot.slane %v340, 1
        %v409 = vrot.slane %v341, 1
        %v410 = vsel %vm400, %v408, %v409
        %v411 = vrot.slane %v342, 1
        %v412 = vsel %vm400, %v409, %v411
        %v413 = vrot.slane %v343, 1
        %v414 = vsel %vm400, %v411, %v413
        %v415 = vrot.slane %v344, 1
        %v416 = vrot.slane %v345, 1
        %v417 = vsel %vm400, %v415, %v416
        %v418 = vrot.slane %v346, 1
        %v419 = vsel %vm400, %v416, %v418
        %v420 = vrot.slane %v347, 1
        %v421 = vsel %vm400, %v418, %v420
        %v422 = vrot.slane %v348, 1
        %v423 = vrot.slane %v349, 1
        %v424 = vsel %vm400, %v422, %v423
        %v425 = vrot.slane %v350, 1
        %v426 = vsel %vm400, %v423, %v425
        %v427 = vrot.slane %v351, 1
        %v428 = vsel %vm400, %v425, %v427
        %v429 = vrot.slane %v352, 1
        %v430 = vrot.slane %v353, 1
        %v431 = vsel %vm400, %v429, %v430
        %v432 = vrot.slane %v354, 1
        %v433 = vsel %vm400, %v430, %v432
        %v434 = vrot.slane %v355, 1
        %v435 = vsel %vm400, %v432, %v434
        %v436 = vrot.slane %v356, 1
        %v437 = vrot.slane %v357, 1
        %v438 = vsel %vm400, %v436, %v437
        %v439 = vrot.slane %v358, 1
        %v440 = vsel %vm400, %v437, %v439
        %v441 = vrot.slane %v359, 1
        %v442 = vsel %vm400, %v439, %v441
        %v443 = vrot.slane %v360, 1
        %v444 = vrot.slane %v361, 1
        %v445 = vsel %vm400, %v443, %v444
        %v446 = vrot.slane %v362, 1
        %v447 = vsel %vm400, %v444, %v446
        %v448 = vrot.slane %v363, 1
        %v449 = vsel %vm400, %v446, %v448
        %v450 = vrot.slane %v364, 1
        %v451 = vrot.slane %v365, 1
        %v452 = vsel %vm400, %v450, %v451
        %v453 = vrot.slane %v366, 1
        %v454 = vsel %vm400, %v451, %v453
        %v455 = vrot.slane %v367, 1
        %v456 = vsel %vm400, %v453, %v455
        %457 = vrot.lane.b32.xlu0 %v403, 28
        %v458 = vpop.permute.xlu0 %457
        %459 = vrot.lane.b32.xlu0 %v405, 28
        %v460 = vpop.permute.xlu0 %459
        %461 = vrot.lane.b32.xlu0 %v407, 28
        %v462 = vpop.permute.xlu0 %461
        %463 = vrot.lane.b32.xlu0 %v410, 28
        %v464 = vpop.permute.xlu0 %463
        %465 = vrot.lane.b32.xlu0 %v412, 28
        %v466 = vpop.permute.xlu0 %465
        %467 = vrot.lane.b32.xlu0 %v414, 28
        %v468 = vpop.permute.xlu0 %467
        %469 = vrot.lane.b32.xlu0 %v417, 28
        %v470 = vpop.permute.xlu0 %469
        %471 = vrot.lane.b32.xlu0 %v419, 28
        %v472 = vpop.permute.xlu0 %471
        %473 = vrot.lane.b32.xlu0 %v421, 28
        %v474 = vpop.permute.xlu0 %473
        %475 = vrot.lane.b32.xlu0 %v424, 28
        %v476 = vpop.permute.xlu0 %475
        %477 = vrot.lane.b32.xlu0 %v426, 28
        %v478 = vpop.permute.xlu0 %477
        %479 = vrot.lane.b32.xlu0 %v428, 28
        %v480 = vpop.permute.xlu0 %479
        %481 = vrot.lane.b32.xlu0 %v431, 28
        %v482 = vpop.permute.xlu0 %481
        %483 = vrot.lane.b32.xlu0 %v433, 28
        %v484 = vpop.permute.xlu0 %483
        %485 = vrot.lane.b32.xlu0 %v435, 28
        %v486 = vpop.permute.xlu0 %485
        %487 = vrot.lane.b32.xlu0 %v438, 28
        %v488 = vpop.permute.xlu0 %487
        %489 = vrot.lane.b32.xlu0 %v440, 28
        %v490 = vpop.permute.xlu0 %489
        %491 = vrot.lane.b32.xlu0 %v442, 28
        %v492 = vpop.permute.xlu0 %491
        %493 = vrot.lane.b32.xlu0 %v445, 28
        %v494 = vpop.permute.xlu0 %493
        %495 = vrot.lane.b32.xlu0 %v447, 28
        %v496 = vpop.permute.xlu0 %495
        %497 = vrot.lane.b32.xlu0 %v449, 28
        %v498 = vpop.permute.xlu0 %497
        %499 = vrot.lane.b32.xlu0 %v452, 28
        %v500 = vpop.permute.xlu0 %499
        %501 = vrot.lane.b32.xlu0 %v454, 28
        %v502 = vpop.permute.xlu0 %501
        %503 = vrot.lane.b32.xlu0 %v456, 28
        %v504 = vpop.permute.xlu0 %503
        %vm529 = vcmask 1045504
        %v530 = vrot.slane %v336, 2
        %v531 = vrot.slane %v337, 2
        %v532 = vsel %vm529, %v530, %v531
        %v533 = vrot.slane %v338, 2
        %v534 = vsel %vm529, %v531, %v533
        %v535 = vrot.slane %v339, 2
        %v536 = vsel %vm529, %v533, %v535
        %v537 = vrot.slane %v340, 2
        %v538 = vrot.slane %v341, 2
        %v539 = vsel %vm529, %v537, %v538
        %v540 = vrot.slane %v342, 2
        %v541 = vsel %vm529, %v538, %v540
        %v542 = vrot.slane %v343, 2
        %v543 = vsel %vm529, %v540, %v542
        %v544 = vrot.slane %v344, 2
        %v545 = vrot.slane %v345, 2
        %v546 = vsel %vm529, %v544, %v545
        %v547 = vrot.slane %v346, 2
        %v548 = vsel %vm529, %v545, %v547
        %v549 = vrot.slane %v347, 2
        %v550 = vsel %vm529, %v547, %v549
        %v551 = vrot.slane %v348, 2
        %v552 = vrot.slane %v349, 2
        %v553 = vsel %vm529, %v551, %v552
        %v554 = vrot.slane %v350, 2
        %v555 = vsel %vm529, %v552, %v554
        %v556 = vrot.slane %v351, 2
        %v557 = vsel %vm529, %v554, %v556
        %v558 = vrot.slane %v352, 2
        %v559 = vrot.slane %v353, 2
        %v560 = vsel %vm529, %v558, %v559
        %v561 = vrot.slane %v354, 2
        %v562 = vsel %vm529, %v559, %v561
        %v563 = vrot.slane %v355, 2
        %v564 = vsel %vm529, %v561, %v563
        %v565 = vrot.slane %v356, 2
        %v566 = vrot.slane %v357, 2
        %v567 = vsel %vm529, %v565, %v566
        %v568 = vrot.slane %v358, 2
        %v569 = vsel %vm529, %v566, %v568
        %v570 = vrot.slane %v359, 2
        %v571 = vsel %vm529, %v568, %v570
        %v572 = vrot.slane %v360, 2
        %v573 = vrot.slane %v361, 2
        %v574 = vsel %vm529, %v572, %v573
        %v575 = vrot.slane %v362, 2
        %v576 = vsel %vm529, %v573, %v575
        %v577 = vrot.slane %v363, 2
        %v578 = vsel %vm529, %v575, %v577
        %v579 = vrot.slane %v364, 2
        %v580 = vrot.slane %v365, 2
        %v581 = vsel %vm529, %v579, %v580
        %v582 = vrot.slane %v366, 2
        %v583 = vsel %vm529, %v580, %v582
        %v584 = vrot.slane %v367, 2
        %v585 = vsel %vm529, %v582, %v584
        %586 = vrot.lane.b32.xlu0 %v532, 56
        %v587 = vpop.permute.xlu0 %586
        %588 = vrot.lane.b32.xlu0 %v534, 56
        %v589 = vpop.permute.xlu0 %588
        %590 = vrot.lane.b32.xlu0 %v536, 56
        %v591 = vpop.permute.xlu0 %590
        %592 = vrot.lane.b32.xlu0 %v539, 56
        %v593 = vpop.permute.xlu0 %592
        %594 = vrot.lane.b32.xlu0 %v541, 56
        %v595 = vpop.permute.xlu0 %594
        %596 = vrot.lane.b32.xlu0 %v543, 56
        %v597 = vpop.permute.xlu0 %596
        %598 = vrot.lane.b32.xlu0 %v546, 56
        %v599 = vpop.permute.xlu0 %598
        %600 = vrot.lane.b32.xlu0 %v548, 56
        %v601 = vpop.permute.xlu0 %600
        %602 = vrot.lane.b32.xlu0 %v550, 56
        %v603 = vpop.permute.xlu0 %602
        %604 = vrot.lane.b32.xlu0 %v553, 56
        %v605 = vpop.permute.xlu0 %604
        %606 = vrot.lane.b32.xlu0 %v555, 56
        %v607 = vpop.permute.xlu0 %606
        %608 = vrot.lane.b32.xlu0 %v557, 56
        %v609 = vpop.permute.xlu0 %608
        %610 = vrot.lane.b32.xlu0 %v560, 56
        %v611 = vpop.permute.xlu0 %610
        %612 = vrot.lane.b32.xlu0 %v562, 56
        %v613 = vpop.permute.xlu0 %612
        %614 = vrot.lane.b32.xlu0 %v564, 56
        %v615 = vpop.permute.xlu0 %614
        %616 = vrot.lane.b32.xlu0 %v567, 56
        %v617 = vpop.permute.xlu0 %616
        %618 = vrot.lane.b32.xlu0 %v569, 56
        %v619 = vpop.permute.xlu0 %618
        %620 = vrot.lane.b32.xlu0 %v571, 56
        %v621 = vpop.permute.xlu0 %620
        %622 = vrot.lane.b32.xlu0 %v574, 56
        %v623 = vpop.permute.xlu0 %622
        %624 = vrot.lane.b32.xlu0 %v576, 56
        %v625 = vpop.permute.xlu0 %624
        %626 = vrot.lane.b32.xlu0 %v578, 56
        %v627 = vpop.permute.xlu0 %626
        %628 = vrot.lane.b32.xlu0 %v581, 56
        %v629 = vpop.permute.xlu0 %628
        %630 = vrot.lane.b32.xlu0 %v583, 56
        %v631 = vpop.permute.xlu0 %630
        %632 = vrot.lane.b32.xlu0 %v585, 56
        %v633 = vpop.permute.xlu0 %632
        %vm658 = vcmask 1044480
        %v659 = vrot.slane %v336, 3
        %v660 = vrot.slane %v337, 3
        %v661 = vsel %vm658, %v659, %v660
        %v662 = vrot.slane %v338, 3
        %v663 = vsel %vm658, %v660, %v662
        %v664 = vrot.slane %v339, 3
        %v665 = vsel %vm658, %v662, %v664
        %v666 = vrot.slane %v340, 3
        %v667 = vrot.slane %v341, 3
        %v668 = vsel %vm658, %v666, %v667
        %v669 = vrot.slane %v342, 3
        %v670 = vsel %vm658, %v667, %v669
        %v671 = vrot.slane %v343, 3
        %v672 = vsel %vm658, %v669, %v671
        %v673 = vrot.slane %v344, 3
        %v674 = vrot.slane %v345, 3
        %v675 = vsel %vm658, %v673, %v674
        %v676 = vrot.slane %v346, 3
        %v677 = vsel %vm658, %v674, %v676
        %v678 = vrot.slane %v347, 3
        %v679 = vsel %vm658, %v676, %v678
        %v680 = vrot.slane %v348, 3
        %v681 = vrot.slane %v349, 3
        %v682 = vsel %vm658, %v680, %v681
        %v683 = vrot.slane %v350, 3
        %v684 = vsel %vm658, %v681, %v683
        %v685 = vrot.slane %v351, 3
        %v686 = vsel %vm658, %v683, %v685
        %v687 = vrot.slane %v352, 3
        %v688 = vrot.slane %v353, 3
        %v689 = vsel %vm658, %v687, %v688
        %v690 = vrot.slane %v354, 3
        %v691 = vsel %vm658, %v688, %v690
        %v692 = vrot.slane %v355, 3
        %v693 = vsel %vm658, %v690, %v692
        %v694 = vrot.slane %v356, 3
        %v695 = vrot.slane %v357, 3
        %v696 = vsel %vm658, %v694, %v695
        %v697 = vrot.slane %v358, 3
        %v698 = vsel %vm658, %v695, %v697
        %v699 = vrot.slane %v359, 3
        %v700 = vsel %vm658, %v697, %v699
        %v701 = vrot.slane %v360, 3
        %v702 = vrot.slane %v361, 3
        %v703 = vsel %vm658, %v701, %v702
        %v704 = vrot.slane %v362, 3
        %v705 = vsel %vm658, %v702, %v704
        %v706 = vrot.slane %v363, 3
        %v707 = vsel %vm658, %v704, %v706
        %v708 = vrot.slane %v364, 3
        %v709 = vrot.slane %v365, 3
        %v710 = vsel %vm658, %v708, %v709
        %v711 = vrot.slane %v366, 3
        %v712 = vsel %vm658, %v709, %v711
        %v713 = vrot.slane %v367, 3
        %v714 = vsel %vm658, %v711, %v713
        %715 = vrot.lane.b32.xlu0 %v661, 84
        %v716 = vpop.permute.xlu0 %715
        %717 = vrot.lane.b32.xlu0 %v663, 84
        %v718 = vpop.permute.xlu0 %717
        %719 = vrot.lane.b32.xlu0 %v665, 84
        %v720 = vpop.permute.xlu0 %719
        %721 = vrot.lane.b32.xlu0 %v668, 84
        %v722 = vpop.permute.xlu0 %721
        %723 = vrot.lane.b32.xlu0 %v670, 84
        %v724 = vpop.permute.xlu0 %723
        %725 = vrot.lane.b32.xlu0 %v672, 84
        %v726 = vpop.permute.xlu0 %725
        %727 = vrot.lane.b32.xlu0 %v675, 84
        %v728 = vpop.permute.xlu0 %727
        %729 = vrot.lane.b32.xlu0 %v677, 84
        %v730 = vpop.permute.xlu0 %729
        %731 = vrot.lane.b32.xlu0 %v679, 84
        %v732 = vpop.permute.xlu0 %731
        %733 = vrot.lane.b32.xlu0 %v682, 84
        %v734 = vpop.permute.xlu0 %733
        %735 = vrot.lane.b32.xlu0 %v684, 84
        %v736 = vpop.permute.xlu0 %735
        %737 = vrot.lane.b32.xlu0 %v686, 84
        %v738 = vpop.permute.xlu0 %737
        %739 = vrot.lane.b32.xlu0 %v689, 84
        %v740 = vpop.permute.xlu0 %739
        %741 = vrot.lane.b32.xlu0 %v691, 84
        %v742 = vpop.permute.xlu0 %741
        %743 = vrot.lane.b32.xlu0 %v693, 84
        %v744 = vpop.permute.xlu0 %743
        %745 = vrot.lane.b32.xlu0 %v696, 84
        %v746 = vpop.permute.xlu0 %745
        %747 = vrot.lane.b32.xlu0 %v698, 84
        %v748 = vpop.permute.xlu0 %747
        %749 = vrot.lane.b32.xlu0 %v700, 84
        %v750 = vpop.permute.xlu0 %749
        %751 = vrot.lane.b32.xlu0 %v703, 84
        %v752 = vpop.permute.xlu0 %751
        %753 = vrot.lane.b32.xlu0 %v705, 84
        %v754 = vpop.permute.xlu0 %753
        %755 = vrot.lane.b32.xlu0 %v707, 84
        %v756 = vpop.permute.xlu0 %755
        %757 = vrot.lane.b32.xlu0 %v710, 84
        %v758 = vpop.permute.xlu0 %757
        %759 = vrot.lane.b32.xlu0 %v712, 84
        %v760 = vpop.permute.xlu0 %759
        %761 = vrot.lane.b32.xlu0 %v714, 84
        %v762 = vpop.permute.xlu0 %761
        %vm787 = vcmask 1043456
        %v788 = vrot.slane %v336, 4
        %v789 = vrot.slane %v337, 4
        %v790 = vsel %vm787, %v788, %v789
        %v791 = vrot.slane %v338, 4
        %v792 = vsel %vm787, %v789, %v791
        %v793 = vrot.slane %v339, 4
        %v794 = vsel %vm787, %v791, %v793
        %v795 = vrot.slane %v340, 4
        %v796 = vrot.slane %v341, 4
        %v797 = vsel %vm787, %v795, %v796
        %v798 = vrot.slane %v342, 4
        %v799 = vsel %vm787, %v796, %v798
        %v800 = vrot.slane %v343, 4
        %v801 = vsel %vm787, %v798, %v800
        %v802 = vrot.slane %v344, 4
        %v803 = vrot.slane %v345, 4
        %v804 = vsel %vm787, %v802, %v803
        %v805 = vrot.slane %v346, 4
        %v806 = vsel %vm787, %v803, %v805
        %v807 = vrot.slane %v347, 4
        %v808 = vsel %vm787, %v805, %v807
        %v809 = vrot.slane %v348, 4
        %v810 = vrot.slane %v349, 4
        %v811 = vsel %vm787, %v809, %v810
        %v812 = vrot.slane %v350, 4
        %v813 = vsel %vm787, %v810, %v812
        %v814 = vrot.slane %v351, 4
        %v815 = vsel %vm787, %v812, %v814
        %v816 = vrot.slane %v352, 4
        %v817 = vrot.slane %v353, 4
        %v818 = vsel %vm787, %v816, %v817
        %v819 = vrot.slane %v354, 4
        %v820 = vsel %vm787, %v817, %v819
        %v821 = vrot.slane %v355, 4
        %v822 = vsel %vm787, %v819, %v821
        %v823 = vrot.slane %v356, 4
        %v824 = vrot.slane %v357, 4
        %v825 = vsel %vm787, %v823, %v824
        %v826 = vrot.slane %v358, 4
        %v827 = vsel %vm787, %v824, %v826
        %v828 = vrot.slane %v359, 4
        %v829 = vsel %vm787, %v826, %v828
        %v830 = vrot.slane %v360, 4
        %v831 = vrot.slane %v361, 4
        %v832 = vsel %vm787, %v830, %v831
        %v833 = vrot.slane %v362, 4
        %v834 = vsel %vm787, %v831, %v833
        %v835 = vrot.slane %v363, 4
        %v836 = vsel %vm787, %v833, %v835
        %v837 = vrot.slane %v364, 4
        %v838 = vrot.slane %v365, 4
        %v839 = vsel %vm787, %v837, %v838
        %v840 = vrot.slane %v366, 4
        %v841 = vsel %vm787, %v838, %v840
        %v842 = vrot.slane %v367, 4
        %v843 = vsel %vm787, %v840, %v842
        %844 = vrot.lane.b32.xlu0 %v790, 112
        %v845 = vpop.permute.xlu0 %844
        %846 = vrot.lane.b32.xlu0 %v792, 112
        %v847 = vpop.permute.xlu0 %846
        %848 = vrot.lane.b32.xlu0 %v794, 112
        %v849 = vpop.permute.xlu0 %848
        %850 = vrot.lane.b32.xlu0 %v797, 112
        %v851 = vpop.permute.xlu0 %850
        %852 = vrot.lane.b32.xlu0 %v799, 112
        %v853 = vpop.permute.xlu0 %852
        %854 = vrot.lane.b32.xlu0 %v801, 112
        %v855 = vpop.permute.xlu0 %854
        %856 = vrot.lane.b32.xlu0 %v804, 112
        %v857 = vpop.permute.xlu0 %856
        %858 = vrot.lane.b32.xlu0 %v806, 112
        %v859 = vpop.permute.xlu0 %858
        %860 = vrot.lane.b32.xlu0 %v808, 112
        %v861 = vpop.permute.xlu0 %860
        %862 = vrot.lane.b32.xlu0 %v811, 112
        %v863 = vpop.permute.xlu0 %862
        %864 = vrot.lane.b32.xlu0 %v813, 112
        %v865 = vpop.permute.xlu0 %864
        %866 = vrot.lane.b32.xlu0 %v815, 112
        %v867 = vpop.permute.xlu0 %866
        %868 = vrot.lane.b32.xlu0 %v818, 112
        %v869 = vpop.permute.xlu0 %868
        %870 = vrot.lane.b32.xlu0 %v820, 112
        %v871 = vpop.permute.xlu0 %870
        %872 = vrot.lane.b32.xlu0 %v822, 112
        %v873 = vpop.permute.xlu0 %872
        %874 = vrot.lane.b32.xlu0 %v825, 112
        %v875 = vpop.permute.xlu0 %874
        %876 = vrot.lane.b32.xlu0 %v827, 112
        %v877 = vpop.permute.xlu0 %876
        %878 = vrot.lane.b32.xlu0 %v829, 112
        %v879 = vpop.permute.xlu0 %878
        %880 = vrot.lane.b32.xlu0 %v832, 112
        %v881 = vpop.permute.xlu0 %880
        %882 = vrot.lane.b32.xlu0 %v834, 112
        %v883 = vpop.permute.xlu0 %882
        %884 = vrot.lane.b32.xlu0 %v836, 112
        %v885 = vpop.permute.xlu0 %884
        %886 = vrot.lane.b32.xlu0 %v839, 112
        %v887 = vpop.permute.xlu0 %886
        %888 = vrot.lane.b32.xlu0 %v841, 112
        %v889 = vpop.permute.xlu0 %888
        %890 = vrot.lane.b32.xlu0 %v843, 112
        %v891 = vpop.permute.xlu0 %890
        %vm916 = vcmask 228352
        %v917 = vsel %vm916, %v336, %v458
        %v918 = vsel %vm916, %v337, %v460
        %v919 = vsel %vm916, %v338, %v462
        %v920 = vsel %vm916, %v340, %v464
        %v921 = vsel %vm916, %v341, %v466
        %v922 = vsel %vm916, %v342, %v468
        %v923 = vsel %vm916, %v344, %v470
        %v924 = vsel %vm916, %v345, %v472
        %v925 = vsel %vm916, %v346, %v474
        %v926 = vsel %vm916, %v348, %v476
        %v927 = vsel %vm916, %v349, %v478
        %v928 = vsel %vm916, %v350, %v480
        %v929 = vsel %vm916, %v352, %v482
        %v930 = vsel %vm916, %v353, %v484
        %v931 = vsel %vm916, %v354, %v486
        %v932 = vsel %vm916, %v356, %v488
        %v933 = vsel %vm916, %v357, %v490
        %v934 = vsel %vm916, %v358, %v492
        %v935 = vsel %vm916, %v360, %v494
        %v936 = vsel %vm916, %v361, %v496
        %v937 = vsel %vm916, %v362, %v498
        %v938 = vsel %vm916, %v364, %v500
        %v939 = vsel %vm916, %v365, %v502
        %v940 = vsel %vm916, %v366, %v504
        %vm941 = vcmask 457728
        %v942 = vsel %vm941, %v917, %v587
        %v943 = vsel %vm941, %v918, %v589
        %v944 = vsel %vm941, %v919, %v591
        %v945 = vsel %vm941, %v920, %v593
        %v946 = vsel %vm941, %v921, %v595
        %v947 = vsel %vm941, %v922, %v597
        %v948 = vsel %vm941, %v923, %v599
        %v949 = vsel %vm941, %v924, %v601
        %v950 = vsel %vm941, %v925, %v603
        %v951 = vsel %vm941, %v926, %v605
        %v952 = vsel %vm941, %v927, %v607
        %v953 = vsel %vm941, %v928, %v609
        %v954 = vsel %vm941, %v929, %v611
        %v955 = vsel %vm941, %v930, %v613
        %v956 = vsel %vm941, %v931, %v615
        %v957 = vsel %vm941, %v932, %v617
        %v958 = vsel %vm941, %v933, %v619
        %v959 = vsel %vm941, %v934, %v621
        %v960 = vsel %vm941, %v935, %v623
        %v961 = vsel %vm941, %v936, %v625
        %v962 = vsel %vm941, %v937, %v627
        %v963 = vsel %vm941, %v938, %v629
        %v964 = vsel %vm941, %v939, %v631
        %v965 = vsel %vm941, %v940, %v633
        %vm966 = vcmask 687104
        %v967 = vsel %vm966, %v942, %v716
        %v968 = vsel %vm966, %v943, %v718
        %v969 = vsel %vm966, %v944, %v720
        %v970 = vsel %vm966, %v945, %v722
        %v971 = vsel %vm966, %v946, %v724
        %v972 = vsel %vm966, %v947, %v726
        %v973 = vsel %vm966, %v948, %v728
        %v974 = vsel %vm966, %v949, %v730
        %v975 = vsel %vm966, %v950, %v732
        %v976 = vsel %vm966, %v951, %v734
        %v977 = vsel %vm966, %v952, %v736
        %v978 = vsel %vm966, %v953, %v738
        %v979 = vsel %vm966, %v954, %v740
        %v980 = vsel %vm966, %v955, %v742
        %v981 = vsel %vm966, %v956, %v744
        %v982 = vsel %vm966, %v957, %v746
        %v983 = vsel %vm966, %v958, %v748
        %v984 = vsel %vm966, %v959, %v750
        %v985 = vsel %vm966, %v960, %v752
        %v986 = vsel %vm966, %v961, %v754
        %v987 = vsel %vm966, %v962, %v756
        %v988 = vsel %vm966, %v963, %v758
        %v989 = vsel %vm966, %v964, %v760
        %v990 = vsel %vm966, %v965, %v762
        %vm991 = vcmask 916480
        %v992 = vsel %vm991, %v967, %v845
        %v993 = vsel %vm991, %v968, %v847
        %v994 = vsel %vm991, %v969, %v849
        %v995 = vsel %vm991, %v970, %v851
        %v996 = vsel %vm991, %v971, %v853
        %v997 = vsel %vm991, %v972, %v855
        %v998 = vsel %vm991, %v973, %v857
        %v999 = vsel %vm991, %v974, %v859
        %v1000 = vsel %vm991, %v975, %v861
        %v1001 = vsel %vm991, %v976, %v863
        %v1002 = vsel %vm991, %v977, %v865
        %v1003 = vsel %vm991, %v978, %v867
        %v1004 = vsel %vm991, %v979, %v869
        %v1005 = vsel %vm991, %v980, %v871
        %v1006 = vsel %vm991, %v981, %v873
        %v1007 = vsel %vm991, %v982, %v875
        %v1008 = vsel %vm991, %v983, %v877
        %v1009 = vsel %vm991, %v984, %v879
        %v1010 = vsel %vm991, %v985, %v881
        %v1011 = vsel %vm991, %v986, %v883
        %v1012 = vsel %vm991, %v987, %v885
        %v1013 = vsel %vm991, %v988, %v887
        %v1014 = vsel %vm991, %v989, %v889
        %v1015 = vsel %vm991, %v990, %v891
        %v1016 = vld [vmem:[%s1] sm:$0xff]
        %v1017 = vld [vmem:[%s1 + $0x8] sm:$0xff]
        %v1018 = vld [vmem:[%s1 + $0x10] sm:$0xff]
        %v1019 = vld [vmem:[%s1 + $0x18] sm:$0xff]
        %v1020 = vld [vmem:[%s1 + $0x20] sm:$0xff]
        %v1021 = vld [vmem:[%s1 + $0x28] sm:$0xff]
        %v1022 = vld [vmem:[%s1 + $0x30] sm:$0xff]
        %v1023 = vld [vmem:[%s1 + $0x38] sm:$0xff]
        %v1024 = vld [vmem:[%s1 + $0x40] sm:$0xff]
        %v1025 = vld [vmem:[%s1 + $0x48] sm:$0xff]
        %v1026 = vld [vmem:[%s1 + $0x50] sm:$0xff]
        %v1027 = vld [vmem:[%s1 + $0x58] sm:$0xff]
        %v1028 = vld [vmem:[%s1 + $0x60] sm:$0xff]
        %v1029 = vld [vmem:[%s1 + $0x68] sm:$0xff]
        %v1030 = vld [vmem:[%s1 + $0x70] sm:$0xff]
        %v1031 = vld [vmem:[%s1 + $0x78] sm:$0xff]
        %v1032 = vld [vmem:[%s1 + $0x80] sm:$0xff]
        %v1033 = vld [vmem:[%s1 + $0x88] sm:$0xf]
        %v1034 = vld [vmem:[%s3] sm:$0x1]
        %v1036 = vperm.slane %v1034, 0
        %vm1038 = vcmask 97280
        %v1039 = vsel %vm1038, %v845, 0
        %v1041 = vsel %vm1038, %v847, 0
        %v1043 = vsel %vm1038, %v849, 0
        %v1045 = vsel %vm1038, %v851, 0
        %v1047 = vsel %vm1038, %v853, 0
        %v1049 = vsel %vm1038, %v855, 0
        %v1051 = vsel %vm1038, %v857, 0
        %v1053 = vsel %vm1038, %v859, 0
        %v1055 = vsel %vm1038, %v861, 0
        %v1057 = vsel %vm1038, %v863, 0
        %v1059 = vsel %vm1038, %v865, 0
        %v1061 = vsel %vm1038, %v867, 0
        %v1063 = vsel %vm1038, %v869, 0
        %v1065 = vsel %vm1038, %v871, 0
        %v1067 = vsel %vm1038, %v873, 0
        %v1069 = vsel %vm1038, %v875, 0
        %v1071 = vsel %vm1038, %v877, 0
        %v1073 = vsel %vm1038, %v879, 0
        %v1075 = vsel %vm1038, %v881, 0
        %v1077 = vsel %vm1038, %v883, 0
        %v1079 = vsel %vm1038, %v885, 0
        %v1081 = vsel %vm1038, %v887, 0
        %v1083 = vsel %vm1038, %v889, 0
        %v1085 = vsel %vm1038, %v891, 0
        %v1088 = vsel %vm787, %v1033, 0
        %1090 = vmatpush.msra.mxu0 %v1031
        %1091 = vmatpush.msra.mxu0 %v1030
        %1092 = vmatpush.msra.mxu0 %v1029
        %1093 = vmatpush.msra.mxu0 %v1028
        %1094 = vmatpush.msra.mxu0 %v1027
        %1095 = vmatpush.msra.mxu0 %v1026
        %1096 = vmatpush.msra.mxu0 %v1025
        %1097 = vmatpush.msra.mxu0 %v1024
        %1098 = vmatpush.msra.mxu0 %v1023
        %1099 = vmatpush.msra.mxu0 %v1022
        %1100 = vmatpush.msra.mxu0 %v1021
        %1101 = vmatpush.msra.mxu0 %v1020
        %1102 = vmatpush.msra.mxu0 %v1019
        %1103 = vmatpush.msra.mxu0 %v1018
        %1104 = vmatpush.msra.mxu0 %v1017
        %1105 = vmatpush.msra.mxu0 %v1016
        %1106 = vmatmul.f32.gmra.mxu0 %v992
        %v1107 = vpop.f32.mrf.mxu0
        %v1108 = vadd.f32 %v1036, %v1107
        %1109 = vmatmul.f32.gmra.mxu0 %v993
        %v1110 = vpop.f32.mrf.mxu0
        %v1111 = vadd.f32 %v1036, %v1110
        %1112 = vmatmul.f32.gmra.mxu0 %v994
        %v1113 = vpop.f32.mrf.mxu0
        %v1114 = vadd.f32 %v1036, %v1113
        %1115 = vmatmul.f32.gmra.mxu0 %v995
        %v1116 = vpop.f32.mrf.mxu0
        %v1117 = vadd.f32 %v1036, %v1116
        %1118 = vmatmul.f32.gmra.mxu0 %v996
        %v1119 = vpop.f32.mrf.mxu0
        %v1120 = vadd.f32 %v1036, %v1119
        %1121 = vmatmul.f32.gmra.mxu0 %v997
        %v1122 = vpop.f32.mrf.mxu0
        %v1123 = vadd.f32 %v1036, %v1122
        %1124 = vmatmul.f32.gmra.mxu0 %v998
        %v1125 = vpop.f32.mrf.mxu0
        %v1126 = vadd.f32 %v1036, %v1125
        %1127 = vmatmul.f32.gmra.mxu0 %v999
        %v1128 = vpop.f32.mrf.mxu0
        %v1129 = vadd.f32 %v1036, %v1128
        %1130 = vmatmul.f32.gmra.mxu0 %v1000
        %v1131 = vpop.f32.mrf.mxu0
        %v1132 = vadd.f32 %v1036, %v1131
        %1133 = vmatmul.f32.gmra.mxu0 %v1001
        %v1134 = vpop.f32.mrf.mxu0
        %v1135 = vadd.f32 %v1036, %v1134
        %1136 = vmatmul.f32.gmra.mxu0 %v1002
        %v1137 = vpop.f32.mrf.mxu0
        %v1138 = vadd.f32 %v1036, %v1137
        %1139 = vmatmul.f32.gmra.mxu0 %v1003
        %v1140 = vpop.f32.mrf.mxu0
        %v1141 = vadd.f32 %v1036, %v1140
        %1142 = vmatmul.f32.gmra.mxu0 %v1004
        %v1143 = vpop.f32.mrf.mxu0
        %v1144 = vadd.f32 %v1036, %v1143
        %1145 = vmatmul.f32.gmra.mxu0 %v1005
        %v1146 = vpop.f32.mrf.mxu0
        %v1147 = vadd.f32 %v1036, %v1146
        %1148 = vmatmul.f32.gmra.mxu0 %v1006
        %v1149 = vpop.f32.mrf.mxu0
        %v1150 = vadd.f32 %v1036, %v1149
        %1151 = vmatmul.f32.gmra.mxu0 %v1007
        %v1152 = vpop.f32.mrf.mxu0
        %v1153 = vadd.f32 %v1036, %v1152
        %1154 = vmatmul.f32.gmra.mxu0 %v1008
        %v1155 = vpop.f32.mrf.mxu0
        %v1156 = vadd.f32 %v1036, %v1155
        %1157 = vmatmul.f32.gmra.mxu0 %v1009
        %v1158 = vpop.f32.mrf.mxu0
        %v1159 = vadd.f32 %v1036, %v1158
        %1160 = vmatmul.f32.gmra.mxu0 %v1010
        %v1161 = vpop.f32.mrf.mxu0
        %v1162 = vadd.f32 %v1036, %v1161
        %1163 = vmatmul.f32.gmra.mxu0 %v1011
        %v1164 = vpop.f32.mrf.mxu0
        %v1165 = vadd.f32 %v1036, %v1164
        %1166 = vmatmul.f32.gmra.mxu0 %v1012
        %v1167 = vpop.f32.mrf.mxu0
        %v1168 = vadd.f32 %v1036, %v1167
        %1169 = vmatmul.f32.gmra.mxu0 %v1013
        %v1170 = vpop.f32.mrf.mxu0
        %v1171 = vadd.f32 %v1036, %v1170
        %1172 = vmatmul.f32.gmra.mxu0 %v1014
        %v1173 = vpop.f32.mrf.mxu0
        %v1174 = vadd.f32 %v1036, %v1173
        %1175 = vmatmul.f32.gmra.mxu0 %v1015
        %v1176 = vpop.f32.mrf.mxu0
        %v1177 = vadd.f32 %v1036, %v1176
        %1178 = vdwg.mxu0
        %1179 = vmatpush.msra.mxu0 0.0
        %1180 = vmatpush.msra.mxu0 0.0
        %1181 = vmatpush.msra.mxu0 0.0
        %1182 = vmatpush.msra.mxu0 0.0
        %1183 = vmatpush.msra.mxu0 0.0
        %1184 = vmatpush.msra.mxu0 0.0
        %1185 = vmatpush.msra.mxu0 0.0
        %1186 = vmatpush.msra.mxu0 0.0
        %1187 = vmatpush.msra.mxu0 0.0
        %1188 = vmatpush.msra.mxu0 0.0
        %1189 = vmatpush.msra.mxu0 0.0
        %1190 = vmatpush.msra.mxu0 0.0
        %1191 = vmatpush.msra.mxu0 0.0
        %1192 = vmatpush.msra.mxu0 0.0
        %1193 = vmatpush.msra.mxu0 %v1088
        %1194 = vmatpush.msra.mxu0 %v1032
        %1195 = vmatmul.f32.gmra.mxu0 %v1039
        %v1196 = vpop.f32.mrf.mxu0
        %v1197 = vadd.f32 %v1108, %v1196
        %1198 = vmatmul.f32.gmra.mxu0 %v1041
        %v1199 = vpop.f32.mrf.mxu0
        %v1200 = vadd.f32 %v1111, %v1199
        %1201 = vmatmul.f32.gmra.mxu0 %v1043
        %v1202 = vpop.f32.mrf.mxu0
        %v1203 = vadd.f32 %v1114, %v1202
        %1204 = vmatmul.f32.gmra.mxu0 %v1045
        %v1205 = vpop.f32.mrf.mxu0
        %v1206 = vadd.f32 %v1117, %v1205
        %1207 = vmatmul.f32.gmra.mxu0 %v1047
        %v1208 = vpop.f32.mrf.mxu0
        %v1209 = vadd.f32 %v1120, %v1208
        %1210 = vmatmul.f32.gmra.mxu0 %v1049
        %v1211 = vpop.f32.mrf.mxu0
        %v1212 = vadd.f32 %v1123, %v1211
        %1213 = vmatmul.f32.gmra.mxu0 %v1051
        %v1214 = vpop.f32.mrf.mxu0
        %v1215 = vadd.f32 %v1126, %v1214
        %1216 = vmatmul.f32.gmra.mxu0 %v1053
        %v1217 = vpop.f32.mrf.mxu0
        %v1218 = vadd.f32 %v1129, %v1217
        %1219 = vmatmul.f32.gmra.mxu0 %v1055
        %v1220 = vpop.f32.mrf.mxu0
        %v1221 = vadd.f32 %v1132, %v1220
        %1222 = vmatmul.f32.gmra.mxu0 %v1057
        %v1223 = vpop.f32.mrf.mxu0
        %v1224 = vadd.f32 %v1135, %v1223
        %1225 = vmatmul.f32.gmra.mxu0 %v1059
        %v1226 = vpop.f32.mrf.mxu0
        %v1227 = vadd.f32 %v1138, %v1226
        %1228 = vmatmul.f32.gmra.mxu0 %v1061
        %v1229 = vpop.f32.mrf.mxu0
        %v1230 = vadd.f32 %v1141, %v1229
        %1231 = vmatmul.f32.gmra.mxu0 %v1063
        %v1232 = vpop.f32.mrf.mxu0
        %v1233 = vadd.f32 %v1144, %v1232
        %1234 = vmatmul.f32.gmra.mxu0 %v1065
        %v1235 = vpop.f32.mrf.mxu0
        %v1236 = vadd.f32 %v1147, %v1235
        %1237 = vmatmul.f32.gmra.mxu0 %v1067
        %v1238 = vpop.f32.mrf.mxu0
        %v1239 = vadd.f32 %v1150, %v1238
        %1240 = vmatmul.f32.gmra.mxu0 %v1069
        %v1241 = vpop.f32.mrf.mxu0
        %v1242 = vadd.f32 %v1153, %v1241
        %1243 = vmatmul.f32.gmra.mxu0 %v1071
        %v1244 = vpop.f32.mrf.mxu0
        %v1245 = vadd.f32 %v1156, %v1244
        %1246 = vmatmul.f32.gmra.mxu0 %v1073
        %v1247 = vpop.f32.mrf.mxu0
        %v1248 = vadd.f32 %v1159, %v1247
        %1249 = vmatmul.f32.gmra.mxu0 %v1075
        %v1250 = vpop.f32.mrf.mxu0
        %v1251 = vadd.f32 %v1162, %v1250
        %1252 = vmatmul.f32.gmra.mxu0 %v1077
        %v1253 = vpop.f32.mrf.mxu0
        %v1254 = vadd.f32 %v1165, %v1253
        %1255 = vmatmul.f32.gmra.mxu0 %v1079
        %v1256 = vpop.f32.mrf.mxu0
        %v1257 = vadd.f32 %v1168, %v1256
        %1258 = vmatmul.f32.gmra.mxu0 %v1081
        %v1259 = vpop.f32.mrf.mxu0
        %v1260 = vadd.f32 %v1171, %v1259
        %1261 = vmatmul.f32.gmra.mxu0 %v1083
        %v1262 = vpop.f32.mrf.mxu0
        %v1263 = vadd.f32 %v1174, %v1262
        %1264 = vmatmul.f32.gmra.mxu0 %v1085
        %v1265 = vpop.f32.mrf.mxu0
        %v1266 = vadd.f32 %v1177, %v1265
        %1267 = vdwg.mxu0
        %v1268 = vld [vmem:[%s2] sm:$0xff]
        %v1269 = vld [vmem:[%s2 + $0x8] sm:$0xff]
        %v1270 = vld [vmem:[%s2 + $0x10] sm:$0xff]
        %v1271 = vld [vmem:[%s2 + $0x18] sm:$0xff]
        %v1272 = vld [vmem:[%s2 + $0x20] sm:$0xff]
        %v1273 = vld [vmem:[%s2 + $0x28] sm:$0xff]
        %v1274 = vld [vmem:[%s2 + $0x30] sm:$0xff]
        %v1275 = vld [vmem:[%s2 + $0x38] sm:$0xff]
        %v1276 = vld [vmem:[%s2 + $0x40] sm:$0xff]
        %v1277 = vld [vmem:[%s2 + $0x48] sm:$0xff]
        %v1278 = vld [vmem:[%s2 + $0x50] sm:$0xff]
        %v1279 = vld [vmem:[%s2 + $0x58] sm:$0xff]
        %v1280 = vld [vmem:[%s2 + $0x60] sm:$0xff]
        %v1281 = vld [vmem:[%s2 + $0x68] sm:$0xff]
        %v1282 = vld [vmem:[%s2 + $0x70] sm:$0xff]
        %v1283 = vld [vmem:[%s2 + $0x78] sm:$0xff]
        %v1284 = vld [vmem:[%s2 + $0x80] sm:$0xff]
        %v1285 = vld [vmem:[%s2 + $0x88] sm:$0xf]
        %v1287 = vsel %vm787, %v1285, 0
        %1289 = vmatpush.msra.mxu0 %v1283
        %1290 = vmatpush.msra.mxu0 %v1282
        %1291 = vmatpush.msra.mxu0 %v1281
        %1292 = vmatpush.msra.mxu0 %v1280
        %1293 = vmatpush.msra.mxu0 %v1279
        %1294 = vmatpush.msra.mxu0 %v1278
        %1295 = vmatpush.msra.mxu0 %v1277
        %1296 = vmatpush.msra.mxu0 %v1276
        %1297 = vmatpush.msra.mxu0 %v1275
        %1298 = vmatpush.msra.mxu0 %v1274
        %1299 = vmatpush.msra.mxu0 %v1273
        %1300 = vmatpush.msra.mxu0 %v1272
        %1301 = vmatpush.msra.mxu0 %v1271
        %1302 = vmatpush.msra.mxu0 %v1270
        %1303 = vmatpush.msra.mxu0 %v1269
        %1304 = vmatpush.msra.mxu0 %v1268
        %1305 = vmatmul.f32.gmra.mxu0 %v992
        %v1306 = vpop.f32.mrf.mxu0
        %v1307 = vadd.f32 %v1036, %v1306
        %1308 = vmatmul.f32.gmra.mxu0 %v993
        %v1309 = vpop.f32.mrf.mxu0
        %v1310 = vadd.f32 %v1036, %v1309
        %1311 = vmatmul.f32.gmra.mxu0 %v994
        %v1312 = vpop.f32.mrf.mxu0
        %v1313 = vadd.f32 %v1036, %v1312
        %1314 = vmatmul.f32.gmra.mxu0 %v995
        %v1315 = vpop.f32.mrf.mxu0
        %v1316 = vadd.f32 %v1036, %v1315
        %1317 = vmatmul.f32.gmra.mxu0 %v996
        %v1318 = vpop.f32.mrf.mxu0
        %v1319 = vadd.f32 %v1036, %v1318
        %1320 = vmatmul.f32.gmra.mxu0 %v997
        %v1321 = vpop.f32.mrf.mxu0
        %v1322 = vadd.f32 %v1036, %v1321
        %1323 = vmatmul.f32.gmra.mxu0 %v998
        %v1324 = vpop.f32.mrf.mxu0
        %v1325 = vadd.f32 %v1036, %v1324
        %1326 = vmatmul.f32.gmra.mxu0 %v999
        %v1327 = vpop.f32.mrf.mxu0
        %v1328 = vadd.f32 %v1036, %v1327
        %1329 = vmatmul.f32.gmra.mxu0 %v1000
        %v1330 = vpop.f32.mrf.mxu0
        %v1331 = vadd.f32 %v1036, %v1330
        %1332 = vmatmul.f32.gmra.mxu0 %v1001
        %v1333 = vpop.f32.mrf.mxu0
        %v1334 = vadd.f32 %v1036, %v1333
        %1335 = vmatmul.f32.gmra.mxu0 %v1002
        %v1336 = vpop.f32.mrf.mxu0
        %v1337 = vadd.f32 %v1036, %v1336
        %1338 = vmatmul.f32.gmra.mxu0 %v1003
        %v1339 = vpop.f32.mrf.mxu0
        %v1340 = vadd.f32 %v1036, %v1339
        %1341 = vmatmul.f32.gmra.mxu0 %v1004
        %v1342 = vpop.f32.mrf.mxu0
        %v1343 = vadd.f32 %v1036, %v1342
        %1344 = vmatmul.f32.gmra.mxu0 %v1005
        %v1345 = vpop.f32.mrf.mxu0
        %v1346 = vadd.f32 %v1036, %v1345
        %1347 = vmatmul.f32.gmra.mxu0 %v1006
        %v1348 = vpop.f32.mrf.mxu0
        %v1349 = vadd.f32 %v1036, %v1348
        %1350 = vmatmul.f32.gmra.mxu0 %v1007
        %v1351 = vpop.f32.mrf.mxu0
        %v1352 = vadd.f32 %v1036, %v1351
        %1353 = vmatmul.f32.gmra.mxu0 %v1008
        %v1354 = vpop.f32.mrf.mxu0
        %v1355 = vadd.f32 %v1036, %v1354
        %1356 = vmatmul.f32.gmra.mxu0 %v1009
        %v1357 = vpop.f32.mrf.mxu0
        %v1358 = vadd.f32 %v1036, %v1357
        %1359 = vmatmul.f32.gmra.mxu0 %v1010
        %v1360 = vpop.f32.mrf.mxu0
        %v1361 = vadd.f32 %v1036, %v1360
        %1362 = vmatmul.f32.gmra.mxu0 %v1011
        %v1363 = vpop.f32.mrf.mxu0
        %v1364 = vadd.f32 %v1036, %v1363
        %1365 = vmatmul.f32.gmra.mxu0 %v1012
        %v1366 = vpop.f32.mrf.mxu0
        %v1367 = vadd.f32 %v1036, %v1366
        %1368 = vmatmul.f32.gmra.mxu0 %v1013
        %v1369 = vpop.f32.mrf.mxu0
        %v1370 = vadd.f32 %v1036, %v1369
        %1371 = vmatmul.f32.gmra.mxu0 %v1014
        %v1372 = vpop.f32.mrf.mxu0
        %v1373 = vadd.f32 %v1036, %v1372
        %1374 = vmatmul.f32.gmra.mxu0 %v1015
        %v1375 = vpop.f32.mrf.mxu0
        %v1376 = vadd.f32 %v1036, %v1375
        %1377 = vdwg.mxu0
        %1378 = vmatpush.msra.mxu0 0.0
        %1379 = vmatpush.msra.mxu0 0.0
        %1380 = vmatpush.msra.mxu0 0.0
        %1381 = vmatpush.msra.mxu0 0.0
        %1382 = vmatpush.msra.mxu0 0.0
        %1383 = vmatpush.msra.mxu0 0.0
        %1384 = vmatpush.msra.mxu0 0.0
        %1385 = vmatpush.msra.mxu0 0.0
        %1386 = vmatpush.msra.mxu0 0.0
        %1387 = vmatpush.msra.mxu0 0.0
        %1388 = vmatpush.msra.mxu0 0.0
        %1389 = vmatpush.msra.mxu0 0.0
        %1390 = vmatpush.msra.mxu0 0.0
        %1391 = vmatpush.msra.mxu0 0.0
        %1392 = vmatpush.msra.mxu0 %v1287
        %1393 = vmatpush.msra.mxu0 %v1284
        %1394 = vmatmul.f32.gmra.mxu0 %v1039
        %v1395 = vpop.f32.mrf.mxu0
        %v1396 = vadd.f32 %v1307, %v1395
        %1397 = vmatmul.f32.gmra.mxu0 %v1041
        %v1398 = vpop.f32.mrf.mxu0
        %v1399 = vadd.f32 %v1310, %v1398
        %1400 = vmatmul.f32.gmra.mxu0 %v1043
        %v1401 = vpop.f32.mrf.mxu0
        %v1402 = vadd.f32 %v1313, %v1401
        %1403 = vmatmul.f32.gmra.mxu0 %v1045
        %v1404 = vpop.f32.mrf.mxu0
        %v1405 = vadd.f32 %v1316, %v1404
        %1406 = vmatmul.f32.gmra.mxu0 %v1047
        %v1407 = vpop.f32.mrf.mxu0
        %v1408 = vadd.f32 %v1319, %v1407
        %1409 = vmatmul.f32.gmra.mxu0 %v1049
        %v1410 = vpop.f32.mrf.mxu0
        %v1411 = vadd.f32 %v1322, %v1410
        %1412 = vmatmul.f32.gmra.mxu0 %v1051
        %v1413 = vpop.f32.mrf.mxu0
        %v1414 = vadd.f32 %v1325, %v1413
        %1415 = vmatmul.f32.gmra.mxu0 %v1053
        %v1416 = vpop.f32.mrf.mxu0
        %v1417 = vadd.f32 %v1328, %v1416
        %1418 = vmatmul.f32.gmra.mxu0 %v1055
        %v1419 = vpop.f32.mrf.mxu0
        %v1420 = vadd.f32 %v1331, %v1419
        %1421 = vmatmul.f32.gmra.mxu0 %v1057
        %v1422 = vpop.f32.mrf.mxu0
        %v1423 = vadd.f32 %v1334, %v1422
        %1424 = vmatmul.f32.gmra.mxu0 %v1059
        %v1425 = vpop.f32.mrf.mxu0
        %v1426 = vadd.f32 %v1337, %v1425
        %1427 = vmatmul.f32.gmra.mxu0 %v1061
        %v1428 = vpop.f32.mrf.mxu0
        %v1429 = vadd.f32 %v1340, %v1428
        %1430 = vmatmul.f32.gmra.mxu0 %v1063
        %v1431 = vpop.f32.mrf.mxu0
        %v1432 = vadd.f32 %v1343, %v1431
        %1433 = vmatmul.f32.gmra.mxu0 %v1065
        %v1434 = vpop.f32.mrf.mxu0
        %v1435 = vadd.f32 %v1346, %v1434
        %1436 = vmatmul.f32.gmra.mxu0 %v1067
        %v1437 = vpop.f32.mrf.mxu0
        %v1438 = vadd.f32 %v1349, %v1437
        %1439 = vmatmul.f32.gmra.mxu0 %v1069
        %v1440 = vpop.f32.mrf.mxu0
        %v1441 = vadd.f32 %v1352, %v1440
        %1442 = vmatmul.f32.gmra.mxu0 %v1071
        %v1443 = vpop.f32.mrf.mxu0
        %v1444 = vadd.f32 %v1355, %v1443
        %1445 = vmatmul.f32.gmra.mxu0 %v1073
        %v1446 = vpop.f32.mrf.mxu0
        %v1447 = vadd.f32 %v1358, %v1446
        %1448 = vmatmul.f32.gmra.mxu0 %v1075
        %v1449 = vpop.f32.mrf.mxu0
        %v1450 = vadd.f32 %v1361, %v1449
        %1451 = vmatmul.f32.gmra.mxu0 %v1077
        %v1452 = vpop.f32.mrf.mxu0
        %v1453 = vadd.f32 %v1364, %v1452
        %1454 = vmatmul.f32.gmra.mxu0 %v1079
        %v1455 = vpop.f32.mrf.mxu0
        %v1456 = vadd.f32 %v1367, %v1455
        %1457 = vmatmul.f32.gmra.mxu0 %v1081
        %v1458 = vpop.f32.mrf.mxu0
        %v1459 = vadd.f32 %v1370, %v1458
        %1460 = vmatmul.f32.gmra.mxu0 %v1083
        %v1461 = vpop.f32.mrf.mxu0
        %v1462 = vadd.f32 %v1373, %v1461
        %1463 = vmatmul.f32.gmra.mxu0 %v1085
        %v1464 = vpop.f32.mrf.mxu0
        %v1465 = vadd.f32 %v1376, %v1464
        %1466 = vdwg.mxu0
        %v1467 = vmax.f32 %v1197, %v1396
        %v1468 = vmax.f32 %v1200, %v1399
        %v1469 = vmax.f32 %v1203, %v1402
        %v1470 = vmax.f32 %v1206, %v1405
        %v1471 = vmax.f32 %v1209, %v1408
        %v1472 = vmax.f32 %v1212, %v1411
        %v1473 = vmax.f32 %v1215, %v1414
        %v1474 = vmax.f32 %v1218, %v1417
        %v1475 = vmax.f32 %v1221, %v1420
        %v1476 = vmax.f32 %v1224, %v1423
        %v1477 = vmax.f32 %v1227, %v1426
        %v1478 = vmax.f32 %v1230, %v1429
        %v1479 = vmax.f32 %v1233, %v1432
        %v1480 = vmax.f32 %v1236, %v1435
        %v1481 = vmax.f32 %v1239, %v1438
        %v1482 = vmax.f32 %v1242, %v1441
        %v1483 = vmax.f32 %v1245, %v1444
        %v1484 = vmax.f32 %v1248, %v1447
        %v1485 = vmax.f32 %v1251, %v1450
        %v1486 = vmax.f32 %v1254, %v1453
        %v1487 = vmax.f32 %v1257, %v1456
        %v1488 = vmax.f32 %v1260, %v1459
        %v1489 = vmax.f32 %v1263, %v1462
        %v1490 = vmax.f32 %v1266, %v1465
        %v1515 = vrot.slane %v1467, 2
        %v1516 = vrot.slane %v1467, 4
        %v1517 = vrot.slane %v1467, 6
        %v1518 = vrot.slane %v1468, 2
        %v1519 = vrot.slane %v1468, 4
        %v1520 = vrot.slane %v1468, 6
        %v1521 = vrot.slane %v1469, 2
        %v1522 = vrot.slane %v1469, 4
        %v1523 = vrot.slane %v1469, 6
        %v1524 = vrot.slane %v1470, 2
        %v1525 = vrot.slane %v1470, 4
        %v1526 = vrot.slane %v1470, 6
        %v1527 = vrot.slane %v1471, 2
        %v1528 = vrot.slane %v1471, 4
        %v1529 = vrot.slane %v1471, 6
        %v1530 = vrot.slane %v1472, 2
        %v1531 = vrot.slane %v1472, 4
        %v1532 = vrot.slane %v1472, 6
        %v1533 = vrot.slane %v1473, 2
        %v1534 = vrot.slane %v1473, 4
        %v1535 = vrot.slane %v1473, 6
        %v1536 = vrot.slane %v1474, 2
        %v1537 = vrot.slane %v1474, 4
        %v1538 = vrot.slane %v1474, 6
        %v1539 = vrot.slane %v1475, 2
        %v1540 = vrot.slane %v1475, 4
        %v1541 = vrot.slane %v1475, 6
        %v1542 = vrot.slane %v1476, 2
        %v1543 = vrot.slane %v1476, 4
        %v1544 = vrot.slane %v1476, 6
        %v1545 = vrot.slane %v1477, 2
        %v1546 = vrot.slane %v1477, 4
        %v1547 = vrot.slane %v1477, 6
        %v1548 = vrot.slane %v1478, 2
        %v1549 = vrot.slane %v1478, 4
        %v1550 = vrot.slane %v1478, 6
        %v1551 = vrot.slane %v1479, 2
        %v1552 = vrot.slane %v1479, 4
        %v1553 = vrot.slane %v1479, 6
        %v1554 = vrot.slane %v1480, 2
        %v1555 = vrot.slane %v1480, 4
        %v1556 = vrot.slane %v1480, 6
        %v1557 = vrot.slane %v1481, 2
        %v1558 = vrot.slane %v1481, 4
        %v1559 = vrot.slane %v1481, 6
        %v1560 = vrot.slane %v1482, 2
        %v1561 = vrot.slane %v1482, 4
        %v1562 = vrot.slane %v1482, 6
        %v1563 = vrot.slane %v1483, 2
        %v1564 = vrot.slane %v1483, 4
        %v1565 = vrot.slane %v1483, 6
        %v1566 = vrot.slane %v1484, 2
        %v1567 = vrot.slane %v1484, 4
        %v1568 = vrot.slane %v1484, 6
        %v1569 = vrot.slane %v1485, 2
        %v1570 = vrot.slane %v1485, 4
        %v1571 = vrot.slane %v1485, 6
        %v1572 = vrot.slane %v1486, 2
        %v1573 = vrot.slane %v1486, 4
        %v1574 = vrot.slane %v1486, 6
        %v1575 = vrot.slane %v1487, 2
        %v1576 = vrot.slane %v1487, 4
        %v1577 = vrot.slane %v1487, 6
        %v1578 = vrot.slane %v1488, 2
        %v1579 = vrot.slane %v1488, 4
        %v1580 = vrot.slane %v1488, 6
        %v1581 = vrot.slane %v1489, 2
        %v1582 = vrot.slane %v1489, 4
        %v1583 = vrot.slane %v1489, 6
        %v1584 = vrot.slane %v1490, 2
        %v1585 = vrot.slane %v1490, 4
        %v1586 = vrot.slane %v1490, 6
        %v1659 = vrot.slane %v1467, 7
        %v1660 = vrot.slane %v1659, 2
        %v1661 = vrot.slane %v1515, 7
        %v1662 = vrot.slane %v1661, 2
        %v1663 = vrot.slane %v1516, 7
        %v1664 = vrot.slane %v1663, 2
        %v1665 = vrot.slane %v1517, 7
        %v1666 = vrot.slane %v1665, 2
        %v1667 = vrot.slane %v1468, 7
        %v1668 = vrot.slane %v1667, 2
        %v1669 = vrot.slane %v1518, 7
        %v1670 = vrot.slane %v1669, 2
        %v1671 = vrot.slane %v1519, 7
        %v1672 = vrot.slane %v1671, 2
        %v1673 = vrot.slane %v1520, 7
        %v1674 = vrot.slane %v1673, 2
        %v1675 = vrot.slane %v1469, 7
        %v1676 = vrot.slane %v1675, 2
        %v1677 = vrot.slane %v1521, 7
        %v1678 = vrot.slane %v1677, 2
        %v1679 = vrot.slane %v1522, 7
        %v1680 = vrot.slane %v1679, 2
        %v1681 = vrot.slane %v1523, 7
        %v1682 = vrot.slane %v1681, 2
        %v1683 = vrot.slane %v1470, 7
        %v1684 = vrot.slane %v1683, 2
        %v1685 = vrot.slane %v1524, 7
        %v1686 = vrot.slane %v1685, 2
        %v1687 = vrot.slane %v1525, 7
        %v1688 = vrot.slane %v1687, 2
        %v1689 = vrot.slane %v1526, 7
        %v1690 = vrot.slane %v1689, 2
        %v1691 = vrot.slane %v1471, 7
        %v1692 = vrot.slane %v1691, 2
        %v1693 = vrot.slane %v1527, 7
        %v1694 = vrot.slane %v1693, 2
        %v1695 = vrot.slane %v1528, 7
        %v1696 = vrot.slane %v1695, 2
        %v1697 = vrot.slane %v1529, 7
        %v1698 = vrot.slane %v1697, 2
        %v1699 = vrot.slane %v1472, 7
        %v1700 = vrot.slane %v1699, 2
        %v1701 = vrot.slane %v1530, 7
        %v1702 = vrot.slane %v1701, 2
        %v1703 = vrot.slane %v1531, 7
        %v1704 = vrot.slane %v1703, 2
        %v1705 = vrot.slane %v1532, 7
        %v1706 = vrot.slane %v1705, 2
        %v1707 = vrot.slane %v1473, 7
        %v1708 = vrot.slane %v1707, 2
        %v1709 = vrot.slane %v1533, 7
        %v1710 = vrot.slane %v1709, 2
        %v1711 = vrot.slane %v1534, 7
        %v1712 = vrot.slane %v1711, 2
        %v1713 = vrot.slane %v1535, 7
        %v1714 = vrot.slane %v1713, 2
        %v1715 = vrot.slane %v1474, 7
        %v1716 = vrot.slane %v1715, 2
        %v1717 = vrot.slane %v1536, 7
        %v1718 = vrot.slane %v1717, 2
        %v1719 = vrot.slane %v1537, 7
        %v1720 = vrot.slane %v1719, 2
        %v1721 = vrot.slane %v1538, 7
        %v1722 = vrot.slane %v1721, 2
        %v1723 = vrot.slane %v1475, 7
        %v1724 = vrot.slane %v1723, 2
        %v1725 = vrot.slane %v1539, 7
        %v1726 = vrot.slane %v1725, 2
        %v1727 = vrot.slane %v1540, 7
        %v1728 = vrot.slane %v1727, 2
        %v1729 = vrot.slane %v1541, 7
        %v1730 = vrot.slane %v1729, 2
        %v1731 = vrot.slane %v1476, 7
        %v1732 = vrot.slane %v1731, 2
        %v1733 = vrot.slane %v1542, 7
        %v1734 = vrot.slane %v1733, 2
        %v1735 = vrot.slane %v1543, 7
        %v1736 = vrot.slane %v1735, 2
        %v1737 = vrot.slane %v1544, 7
        %v1738 = vrot.slane %v1737, 2
        %v1739 = vrot.slane %v1477, 7
        %v1740 = vrot.slane %v1739, 2
        %v1741 = vrot.slane %v1545, 7
        %v1742 = vrot.slane %v1741, 2
        %v1743 = vrot.slane %v1546, 7
        %v1744 = vrot.slane %v1743, 2
        %v1745 = vrot.slane %v1547, 7
        %v1746 = vrot.slane %v1745, 2
        %v1747 = vrot.slane %v1478, 7
        %v1748 = vrot.slane %v1747, 2
        %v1749 = vrot.slane %v1548, 7
        %v1750 = vrot.slane %v1749, 2
        %v1751 = vrot.slane %v1549, 7
        %v1752 = vrot.slane %v1751, 2
        %v1753 = vrot.slane %v1550, 7
        %v1754 = vrot.slane %v1753, 2
        %v1755 = vrot.slane %v1479, 7
        %v1756 = vrot.slane %v1755, 2
        %v1757 = vrot.slane %v1551, 7
        %v1758 = vrot.slane %v1757, 2
        %v1759 = vrot.slane %v1552, 7
        %v1760 = vrot.slane %v1759, 2
        %v1761 = vrot.slane %v1553, 7
        %v1762 = vrot.slane %v1761, 2
        %v1763 = vrot.slane %v1480, 7
        %v1764 = vrot.slane %v1763, 2
        %v1765 = vrot.slane %v1554, 7
        %v1766 = vrot.slane %v1765, 2
        %v1767 = vrot.slane %v1555, 7
        %v1768 = vrot.slane %v1767, 2
        %v1769 = vrot.slane %v1556, 7
        %v1770 = vrot.slane %v1769, 2
        %v1771 = vrot.slane %v1481, 7
        %v1772 = vrot.slane %v1771, 2
        %v1773 = vrot.slane %v1557, 7
        %v1774 = vrot.slane %v1773, 2
        %v1775 = vrot.slane %v1558, 7
        %v1776 = vrot.slane %v1775, 2
        %v1777 = vrot.slane %v1559, 7
        %v1778 = vrot.slane %v1777, 2
        %v1779 = vrot.slane %v1482, 7
        %v1780 = vrot.slane %v1779, 2
        %v1781 = vrot.slane %v1560, 7
        %v1782 = vrot.slane %v1781, 2
        %v1783 = vrot.slane %v1561, 7
        %v1784 = vrot.slane %v1783, 2
        %v1785 = vrot.slane %v1562, 7
        %v1786 = vrot.slane %v1785, 2
        %v1787 = vrot.slane %v1483, 7
        %v1788 = vrot.slane %v1787, 2
        %v1789 = vrot.slane %v1563, 7
        %v1790 = vrot.slane %v1789, 2
        %v1791 = vrot.slane %v1564, 7
        %v1792 = vrot.slane %v1791, 2
        %v1793 = vrot.slane %v1565, 7
        %v1794 = vrot.slane %v1793, 2
        %v1795 = vrot.slane %v1484, 7
        %v1796 = vrot.slane %v1795, 2
        %v1797 = vrot.slane %v1566, 7
        %v1798 = vrot.slane %v1797, 2
        %v1799 = vrot.slane %v1567, 7
        %v1800 = vrot.slane %v1799, 2
        %v1801 = vrot.slane %v1568, 7
        %v1802 = vrot.slane %v1801, 2
        %v1803 = vrot.slane %v1485, 7
        %v1804 = vrot.slane %v1803, 2
        %v1805 = vrot.slane %v1569, 7
        %v1806 = vrot.slane %v1805, 2
        %v1807 = vrot.slane %v1570, 7
        %v1808 = vrot.slane %v1807, 2
        %v1809 = vrot.slane %v1571, 7
        %v1810 = vrot.slane %v1809, 2
        %v1811 = vrot.slane %v1486, 7
        %v1812 = vrot.slane %v1811, 2
        %v1813 = vrot.slane %v1572, 7
        %v1814 = vrot.slane %v1813, 2
        %v1815 = vrot.slane %v1573, 7
        %v1816 = vrot.slane %v1815, 2
        %v1817 = vrot.slane %v1574, 7
        %v1818 = vrot.slane %v1817, 2
        %v1819 = vrot.slane %v1487, 7
        %v1820 = vrot.slane %v1819, 2
        %v1821 = vrot.slane %v1575, 7
        %v1822 = vrot.slane %v1821, 2
        %v1823 = vrot.slane %v1576, 7
        %v1824 = vrot.slane %v1823, 2
        %v1825 = vrot.slane %v1577, 7
        %v1826 = vrot.slane %v1825, 2
        %v1827 = vrot.slane %v1488, 7
        %v1828 = vrot.slane %v1827, 2
        %v1829 = vrot.slane %v1578, 7
        %v1830 = vrot.slane %v1829, 2
        %v1831 = vrot.slane %v1579, 7
        %v1832 = vrot.slane %v1831, 2
        %v1833 = vrot.slane %v1580, 7
        %v1834 = vrot.slane %v1833, 2
        %v1835 = vrot.slane %v1489, 7
        %v1836 = vrot.slane %v1835, 2
        %v1837 = vrot.slane %v1581, 7
        %v1838 = vrot.slane %v1837, 2
        %v1839 = vrot.slane %v1582, 7
        %v1840 = vrot.slane %v1839, 2
        %v1841 = vrot.slane %v1583, 7
        %v1842 = vrot.slane %v1841, 2
        %v1843 = vrot.slane %v1490, 7
        %v1844 = vrot.slane %v1843, 2
        %v1845 = vrot.slane %v1584, 7
        %v1846 = vrot.slane %v1845, 2
        %v1847 = vrot.slane %v1585, 7
        %v1848 = vrot.slane %v1847, 2
        %v1849 = vrot.slane %v1586, 7
        %v1850 = vrot.slane %v1849, 2
        %v1947 = vmax.f32 %v1467, %v1660
        %v1948 = vmax.f32 %v1515, %v1662
        %v1949 = vmax.f32 %v1516, %v1664
        %v1950 = vmax.f32 %v1517, %v1666
        %v1951 = vmax.f32 %v1468, %v1668
        %v1952 = vmax.f32 %v1518, %v1670
        %v1953 = vmax.f32 %v1519, %v1672
        %v1954 = vmax.f32 %v1520, %v1674
        %v1955 = vmax.f32 %v1469, %v1676
        %v1956 = vmax.f32 %v1521, %v1678
        %v1957 = vmax.f32 %v1522, %v1680
        %v1958 = vmax.f32 %v1523, %v1682
        %v1959 = vmax.f32 %v1470, %v1684
        %v1960 = vmax.f32 %v1524, %v1686
        %v1961 = vmax.f32 %v1525, %v1688
        %v1962 = vmax.f32 %v1526, %v1690
        %v1963 = vmax.f32 %v1471, %v1692
        %v1964 = vmax.f32 %v1527, %v1694
        %v1965 = vmax.f32 %v1528, %v1696
        %v1966 = vmax.f32 %v1529, %v1698
        %v1967 = vmax.f32 %v1472, %v1700
        %v1968 = vmax.f32 %v1530, %v1702
        %v1969 = vmax.f32 %v1531, %v1704
        %v1970 = vmax.f32 %v1532, %v1706
        %v1971 = vmax.f32 %v1473, %v1708
        %v1972 = vmax.f32 %v1533, %v1710
        %v1973 = vmax.f32 %v1534, %v1712
        %v1974 = vmax.f32 %v1535, %v1714
        %v1975 = vmax.f32 %v1474, %v1716
        %v1976 = vmax.f32 %v1536, %v1718
        %v1977 = vmax.f32 %v1537, %v1720
        %v1978 = vmax.f32 %v1538, %v1722
        %v1979 = vmax.f32 %v1475, %v1724
        %v1980 = vmax.f32 %v1539, %v1726
        %v1981 = vmax.f32 %v1540, %v1728
        %v1982 = vmax.f32 %v1541, %v1730
        %v1983 = vmax.f32 %v1476, %v1732
        %v1984 = vmax.f32 %v1542, %v1734
        %v1985 = vmax.f32 %v1543, %v1736
        %v1986 = vmax.f32 %v1544, %v1738
        %v1987 = vmax.f32 %v1477, %v1740
        %v1988 = vmax.f32 %v1545, %v1742
        %v1989 = vmax.f32 %v1546, %v1744
        %v1990 = vmax.f32 %v1547, %v1746
        %v1991 = vmax.f32 %v1478, %v1748
        %v1992 = vmax.f32 %v1548, %v1750
        %v1993 = vmax.f32 %v1549, %v1752
        %v1994 = vmax.f32 %v1550, %v1754
        %v1995 = vmax.f32 %v1479, %v1756
        %v1996 = vmax.f32 %v1551, %v1758
        %v1997 = vmax.f32 %v1552, %v1760
        %v1998 = vmax.f32 %v1553, %v1762
        %v1999 = vmax.f32 %v1480, %v1764
        %v2000 = vmax.f32 %v1554, %v1766
        %v2001 = vmax.f32 %v1555, %v1768
        %v2002 = vmax.f32 %v1556, %v1770
        %v2003 = vmax.f32 %v1481, %v1772
        %v2004 = vmax.f32 %v1557, %v1774
        %v2005 = vmax.f32 %v1558, %v1776
        %v2006 = vmax.f32 %v1559, %v1778
        %v2007 = vmax.f32 %v1482, %v1780
        %v2008 = vmax.f32 %v1560, %v1782
        %v2009 = vmax.f32 %v1561, %v1784
        %v2010 = vmax.f32 %v1562, %v1786
        %v2011 = vmax.f32 %v1483, %v1788
        %v2012 = vmax.f32 %v1563, %v1790
        %v2013 = vmax.f32 %v1564, %v1792
        %v2014 = vmax.f32 %v1565, %v1794
        %v2015 = vmax.f32 %v1484, %v1796
        %v2016 = vmax.f32 %v1566, %v1798
        %v2017 = vmax.f32 %v1567, %v1800
        %v2018 = vmax.f32 %v1568, %v1802
        %v2019 = vmax.f32 %v1485, %v1804
        %v2020 = vmax.f32 %v1569, %v1806
        %v2021 = vmax.f32 %v1570, %v1808
        %v2022 = vmax.f32 %v1571, %v1810
        %v2023 = vmax.f32 %v1486, %v1812
        %v2024 = vmax.f32 %v1572, %v1814
        %v2025 = vmax.f32 %v1573, %v1816
        %v2026 = vmax.f32 %v1574, %v1818
        %v2027 = vmax.f32 %v1487, %v1820
        %v2028 = vmax.f32 %v1575, %v1822
        %v2029 = vmax.f32 %v1576, %v1824
        %v2030 = vmax.f32 %v1577, %v1826
        %v2031 = vmax.f32 %v1488, %v1828
        %v2032 = vmax.f32 %v1578, %v1830
        %v2033 = vmax.f32 %v1579, %v1832
        %v2034 = vmax.f32 %v1580, %v1834
        %v2035 = vmax.f32 %v1489, %v1836
        %v2036 = vmax.f32 %v1581, %v1838
        %v2037 = vmax.f32 %v1582, %v1840
        %v2038 = vmax.f32 %v1583, %v1842
        %v2039 = vmax.f32 %v1490, %v1844
        %v2040 = vmax.f32 %v1584, %v1846
        %v2041 = vmax.f32 %v1585, %v1848
        %v2042 = vmax.f32 %v1586, %v1850
        %v2107 = vperm.slane %v1947, 0
        %v2108 = vperm.slane %v1948, 0
        %v2109 = vperm.slane %v1949, 0
        %v2110 = vperm.slane %v1950, 0
        %v2111 = vperm.slane %v1951, 0
        %v2112 = vperm.slane %v1952, 0
        %v2113 = vperm.slane %v1953, 0
        %v2114 = vperm.slane %v1954, 0
        %v2115 = vperm.slane %v1959, 0
        %v2116 = vperm.slane %v1960, 0
        %v2117 = vperm.slane %v1961, 0
        %v2118 = vperm.slane %v1962, 0
        %v2119 = vperm.slane %v1963, 0
        %v2120 = vperm.slane %v1964, 0
        %v2121 = vperm.slane %v1965, 0
        %v2122 = vperm.slane %v1966, 0
        %v2123 = vperm.slane %v1971, 0
        %v2124 = vperm.slane %v1972, 0
        %v2125 = vperm.slane %v1973, 0
        %v2126 = vperm.slane %v1974, 0
        %v2127 = vperm.slane %v1975, 0
        %v2128 = vperm.slane %v1976, 0
        %v2129 = vperm.slane %v1977, 0
        %v2130 = vperm.slane %v1978, 0
        %v2131 = vperm.slane %v1983, 0
        %v2132 = vperm.slane %v1984, 0
        %v2133 = vperm.slane %v1985, 0
        %v2134 = vperm.slane %v1986, 0
        %v2135 = vperm.slane %v1987, 0
        %v2136 = vperm.slane %v1988, 0
        %v2137 = vperm.slane %v1989, 0
        %v2138 = vperm.slane %v1990, 0
        %v2139 = vperm.slane %v1995, 0
        %v2140 = vperm.slane %v1996, 0
        %v2141 = vperm.slane %v1997, 0
        %v2142 = vperm.slane %v1998, 0
        %v2143 = vperm.slane %v1999, 0
        %v2144 = vperm.slane %v2000, 0
        %v2145 = vperm.slane %v2001, 0
        %v2146 = vperm.slane %v2002, 0
        %v2147 = vperm.slane %v2007, 0
        %v2148 = vperm.slane %v2008, 0
        %v2149 = vperm.slane %v2009, 0
        %v2150 = vperm.slane %v2010, 0
        %v2151 = vperm.slane %v2011, 0
        %v2152 = vperm.slane %v2012, 0
        %v2153 = vperm.slane %v2013, 0
        %v2154 = vperm.slane %v2014, 0
        %v2155 = vperm.slane %v2019, 0
        %v2156 = vperm.slane %v2020, 0
        %v2157 = vperm.slane %v2021, 0
        %v2158 = vperm.slane %v2022, 0
        %v2159 = vperm.slane %v2023, 0
        %v2160 = vperm.slane %v2024, 0
        %v2161 = vperm.slane %v2025, 0
        %v2162 = vperm.slane %v2026, 0
        %v2163 = vperm.slane %v2031, 0
        %v2164 = vperm.slane %v2032, 0
        %v2165 = vperm.slane %v2033, 0
        %v2166 = vperm.slane %v2034, 0
        %v2167 = vperm.slane %v2035, 0
        %v2168 = vperm.slane %v2036, 0
        %v2169 = vperm.slane %v2037, 0
        %v2170 = vperm.slane %v2038, 0
        %vm2171 = vcmask 1041409
        %v2172 = vsel %vm2171, %v2108, %v2107
        %vm2173 = vcmask 1042434
        %v2174 = vsel %vm2173, %v2109, %v2172
        %vm2175 = vcmask 1043459
        %v2176 = vsel %vm2175, %v2110, %v2174
        %vm2177 = vcmask 1044484
        %v2178 = vsel %vm2177, %v2111, %v2176
        %vm2179 = vcmask 1045509
        %v2180 = vsel %vm2179, %v2112, %v2178
        %vm2181 = vcmask 1046534
        %v2182 = vsel %vm2181, %v2113, %v2180
        %vm2183 = vcmask 1047559
        %v2184 = vsel %vm2183, %v2114, %v2182
        %v2185 = vsel %vm2171, %v2116, %v2115
        %v2186 = vsel %vm2173, %v2117, %v2185
        %v2187 = vsel %vm2175, %v2118, %v2186
        %v2188 = vsel %vm2177, %v2119, %v2187
        %v2189 = vsel %vm2179, %v2120, %v2188
        %v2190 = vsel %vm2181, %v2121, %v2189
        %v2191 = vsel %vm2183, %v2122, %v2190
        %v2192 = vsel %vm2171, %v2124, %v2123
        %v2193 = vsel %vm2173, %v2125, %v2192
        %v2194 = vsel %vm2175, %v2126, %v2193
        %v2195 = vsel %vm2177, %v2127, %v2194
        %v2196 = vsel %vm2179, %v2128, %v2195
        %v2197 = vsel %vm2181, %v2129, %v2196
        %v2198 = vsel %vm2183, %v2130, %v2197
        %v2199 = vsel %vm2171, %v2132, %v2131
        %v2200 = vsel %vm2173, %v2133, %v2199
        %v2201 = vsel %vm2175, %v2134, %v2200
        %v2202 = vsel %vm2177, %v2135, %v2201
        %v2203 = vsel %vm2179, %v2136, %v2202
        %v2204 = vsel %vm2181, %v2137, %v2203
        %v2205 = vsel %vm2183, %v2138, %v2204
        %v2206 = vsel %vm2171, %v2140, %v2139
        %v2207 = vsel %vm2173, %v2141, %v2206
        %v2208 = vsel %vm2175, %v2142, %v2207
        %v2209 = vsel %vm2177, %v2143, %v2208
        %v2210 = vsel %vm2179, %v2144, %v2209
        %v2211 = vsel %vm2181, %v2145, %v2210
        %v2212 = vsel %vm2183, %v2146, %v2211
        %v2213 = vsel %vm2171, %v2148, %v2147
        %v2214 = vsel %vm2173, %v2149, %v2213
        %v2215 = vsel %vm2175, %v2150, %v2214
        %v2216 = vsel %vm2177, %v2151, %v2215
        %v2217 = vsel %vm2179, %v2152, %v2216
        %v2218 = vsel %vm2181, %v2153, %v2217
        %v2219 = vsel %vm2183, %v2154, %v2218
        %v2220 = vsel %vm2171, %v2156, %v2155
        %v2221 = vsel %vm2173, %v2157, %v2220
        %v2222 = vsel %vm2175, %v2158, %v2221
        %v2223 = vsel %vm2177, %v2159, %v2222
        %v2224 = vsel %vm2179, %v2160, %v2223
        %v2225 = vsel %vm2181, %v2161, %v2224
        %v2226 = vsel %vm2183, %v2162, %v2225
        %v2227 = vsel %vm2171, %v2164, %v2163
        %v2228 = vsel %vm2173, %v2165, %v2227
        %v2229 = vsel %vm2175, %v2166, %v2228
        %v2230 = vsel %vm2177, %v2167, %v2229
        %v2231 = vsel %vm2179, %v2168, %v2230
        %v2232 = vsel %vm2181, %v2169, %v2231
        %v2233 = vsel %vm2183, %v2170, %v2232
        %v2250 = vperm.slane %v1955, 0
        %v2251 = vperm.slane %v1967, 0
        %v2252 = vperm.slane %v1979, 0
        %v2253 = vperm.slane %v1991, 0
        %v2254 = vperm.slane %v2003, 0
        %v2255 = vperm.slane %v2015, 0
        %v2256 = vperm.slane %v2027, 0
        %v2257 = vperm.slane %v2039, 0
        %v2258 = vsel %vm2171, %v2109, %v2108
        %v2259 = vsel %vm2173, %v2110, %v2258
        %v2260 = vsel %vm2175, %v2111, %v2259
        %v2261 = vsel %vm2177, %v2112, %v2260
        %v2262 = vsel %vm2179, %v2113, %v2261
        %v2263 = vsel %vm2181, %v2114, %v2262
        %v2264 = vsel %vm2183, %v2250, %v2263
        %v2265 = vsel %vm2171, %v2117, %v2116
        %v2266 = vsel %vm2173, %v2118, %v2265
        %v2267 = vsel %vm2175, %v2119, %v2266
        %v2268 = vsel %vm2177, %v2120, %v2267
        %v2269 = vsel %vm2179, %v2121, %v2268
        %v2270 = vsel %vm2181, %v2122, %v2269
        %v2271 = vsel %vm2183, %v2251, %v2270
        %v2272 = vsel %vm2171, %v2125, %v2124
        %v2273 = vsel %vm2173, %v2126, %v2272
        %v2274 = vsel %vm2175, %v2127, %v2273
        %v2275 = vsel %vm2177, %v2128, %v2274
        %v2276 = vsel %vm2179, %v2129, %v2275
        %v2277 = vsel %vm2181, %v2130, %v2276
        %v2278 = vsel %vm2183, %v2252, %v2277
        %v2279 = vsel %vm2171, %v2133, %v2132
        %v2280 = vsel %vm2173, %v2134, %v2279
        %v2281 = vsel %vm2175, %v2135, %v2280
        %v2282 = vsel %vm2177, %v2136, %v2281
        %v2283 = vsel %vm2179, %v2137, %v2282
        %v2284 = vsel %vm2181, %v2138, %v2283
        %v2285 = vsel %vm2183, %v2253, %v2284
        %v2286 = vsel %vm2171, %v2141, %v2140
        %v2287 = vsel %vm2173, %v2142, %v2286
        %v2288 = vsel %vm2175, %v2143, %v2287
        %v2289 = vsel %vm2177, %v2144, %v2288
        %v2290 = vsel %vm2179, %v2145, %v2289
        %v2291 = vsel %vm2181, %v2146, %v2290
        %v2292 = vsel %vm2183, %v2254, %v2291
        %v2293 = vsel %vm2171, %v2149, %v2148
        %v2294 = vsel %vm2173, %v2150, %v2293
        %v2295 = vsel %vm2175, %v2151, %v2294
        %v2296 = vsel %vm2177, %v2152, %v2295
        %v2297 = vsel %vm2179, %v2153, %v2296
        %v2298 = vsel %vm2181, %v2154, %v2297
        %v2299 = vsel %vm2183, %v2255, %v2298
        %v2300 = vsel %vm2171, %v2157, %v2156
        %v2301 = vsel %vm2173, %v2158, %v2300
        %v2302 = vsel %vm2175, %v2159, %v2301
        %v2303 = vsel %vm2177, %v2160, %v2302
        %v2304 = vsel %vm2179, %v2161, %v2303
        %v2305 = vsel %vm2181, %v2162, %v2304
        %v2306 = vsel %vm2183, %v2256, %v2305
        %v2307 = vsel %vm2171, %v2165, %v2164
        %v2308 = vsel %vm2173, %v2166, %v2307
        %v2309 = vsel %vm2175, %v2167, %v2308
        %v2310 = vsel %vm2177, %v2168, %v2309
        %v2311 = vsel %vm2179, %v2169, %v2310
        %v2312 = vsel %vm2181, %v2170, %v2311
        %v2313 = vsel %vm2183, %v2257, %v2312
        %2314 = vrot.lane.b32.xlu0 %v2264, 72
        %v2315 = vpop.permute.xlu0 %2314
        %2316 = vrot.lane.b32.xlu0 %v2271, 72
        %v2317 = vpop.permute.xlu0 %2316
        %2318 = vrot.lane.b32.xlu0 %v2278, 72
        %v2319 = vpop.permute.xlu0 %2318
        %2320 = vrot.lane.b32.xlu0 %v2285, 72
        %v2321 = vpop.permute.xlu0 %2320
        %2322 = vrot.lane.b32.xlu0 %v2292, 72
        %v2323 = vpop.permute.xlu0 %2322
        %2324 = vrot.lane.b32.xlu0 %v2299, 72
        %v2325 = vpop.permute.xlu0 %2324
        %2326 = vrot.lane.b32.xlu0 %v2306, 72
        %v2327 = vpop.permute.xlu0 %2326
        %2328 = vrot.lane.b32.xlu0 %v2313, 72
        %v2329 = vpop.permute.xlu0 %2328
        %v2346 = vperm.slane %v1956, 0
        %v2347 = vperm.slane %v1968, 0
        %v2348 = vperm.slane %v1980, 0
        %v2349 = vperm.slane %v1992, 0
        %v2350 = vperm.slane %v2004, 0
        %v2351 = vperm.slane %v2016, 0
        %v2352 = vperm.slane %v2028, 0
        %v2353 = vperm.slane %v2040, 0
        %v2354 = vsel %vm2171, %v2110, %v2109
        %v2355 = vsel %vm2173, %v2111, %v2354
        %v2356 = vsel %vm2175, %v2112, %v2355
        %v2357 = vsel %vm2177, %v2113, %v2356
        %v2358 = vsel %vm2179, %v2114, %v2357
        %v2359 = vsel %vm2181, %v2250, %v2358
        %v2360 = vsel %vm2183, %v2346, %v2359
        %v2361 = vsel %vm2171, %v2118, %v2117
        %v2362 = vsel %vm2173, %v2119, %v2361
        %v2363 = vsel %vm2175, %v2120, %v2362
        %v2364 = vsel %vm2177, %v2121, %v2363
        %v2365 = vsel %vm2179, %v2122, %v2364
        %v2366 = vsel %vm2181, %v2251, %v2365
        %v2367 = vsel %vm2183, %v2347, %v2366
        %v2368 = vsel %vm2171, %v2126, %v2125
        %v2369 = vsel %vm2173, %v2127, %v2368
        %v2370 = vsel %vm2175, %v2128, %v2369
        %v2371 = vsel %vm2177, %v2129, %v2370
        %v2372 = vsel %vm2179, %v2130, %v2371
        %v2373 = vsel %vm2181, %v2252, %v2372
        %v2374 = vsel %vm2183, %v2348, %v2373
        %v2375 = vsel %vm2171, %v2134, %v2133
        %v2376 = vsel %vm2173, %v2135, %v2375
        %v2377 = vsel %vm2175, %v2136, %v2376
        %v2378 = vsel %vm2177, %v2137, %v2377
        %v2379 = vsel %vm2179, %v2138, %v2378
        %v2380 = vsel %vm2181, %v2253, %v2379
        %v2381 = vsel %vm2183, %v2349, %v2380
        %v2382 = vsel %vm2171, %v2142, %v2141
        %v2383 = vsel %vm2173, %v2143, %v2382
        %v2384 = vsel %vm2175, %v2144, %v2383
        %v2385 = vsel %vm2177, %v2145, %v2384
        %v2386 = vsel %vm2179, %v2146, %v2385
        %v2387 = vsel %vm2181, %v2254, %v2386
        %v2388 = vsel %vm2183, %v2350, %v2387
        %v2389 = vsel %vm2171, %v2150, %v2149
        %v2390 = vsel %vm2173, %v2151, %v2389
        %v2391 = vsel %vm2175, %v2152, %v2390
        %v2392 = vsel %vm2177, %v2153, %v2391
        %v2393 = vsel %vm2179, %v2154, %v2392
        %v2394 = vsel %vm2181, %v2255, %v2393
        %v2395 = vsel %vm2183, %v2351, %v2394
        %v2396 = vsel %vm2171, %v2158, %v2157
        %v2397 = vsel %vm2173, %v2159, %v2396
        %v2398 = vsel %vm2175, %v2160, %v2397
        %v2399 = vsel %vm2177, %v2161, %v2398
        %v2400 = vsel %vm2179, %v2162, %v2399
        %v2401 = vsel %vm2181, %v2256, %v2400
        %v2402 = vsel %vm2183, %v2352, %v2401
        %v2403 = vsel %vm2171, %v2166, %v2165
        %v2404 = vsel %vm2173, %v2167, %v2403
        %v2405 = vsel %vm2175, %v2168, %v2404
        %v2406 = vsel %vm2177, %v2169, %v2405
        %v2407 = vsel %vm2179, %v2170, %v2406
        %v2408 = vsel %vm2181, %v2257, %v2407
        %v2409 = vsel %vm2183, %v2353, %v2408
        %2410 = vrot.lane.b32.xlu0 %v2360, 16
        %v2411 = vpop.permute.xlu0 %2410
        %2412 = vrot.lane.b32.xlu0 %v2367, 16
        %v2413 = vpop.permute.xlu0 %2412
        %2414 = vrot.lane.b32.xlu0 %v2374, 16
        %v2415 = vpop.permute.xlu0 %2414
        %2416 = vrot.lane.b32.xlu0 %v2381, 16
        %v2417 = vpop.permute.xlu0 %2416
        %2418 = vrot.lane.b32.xlu0 %v2388, 16
        %v2419 = vpop.permute.xlu0 %2418
        %2420 = vrot.lane.b32.xlu0 %v2395, 16
        %v2421 = vpop.permute.xlu0 %2420
        %2422 = vrot.lane.b32.xlu0 %v2402, 16
        %v2423 = vpop.permute.xlu0 %2422
        %2424 = vrot.lane.b32.xlu0 %v2409, 16
        %v2425 = vpop.permute.xlu0 %2424
        %v2442 = vperm.slane %v1957, 0
        %v2443 = vperm.slane %v1969, 0
        %v2444 = vperm.slane %v1981, 0
        %v2445 = vperm.slane %v1993, 0
        %v2446 = vperm.slane %v2005, 0
        %v2447 = vperm.slane %v2017, 0
        %v2448 = vperm.slane %v2029, 0
        %v2449 = vperm.slane %v2041, 0
        %v2450 = vsel %vm2171, %v2111, %v2110
        %v2451 = vsel %vm2173, %v2112, %v2450
        %v2452 = vsel %vm2175, %v2113, %v2451
        %v2453 = vsel %vm2177, %v2114, %v2452
        %v2454 = vsel %vm2179, %v2250, %v2453
        %v2455 = vsel %vm2181, %v2346, %v2454
        %v2456 = vsel %vm2183, %v2442, %v2455
        %v2457 = vsel %vm2171, %v2119, %v2118
        %v2458 = vsel %vm2173, %v2120, %v2457
        %v2459 = vsel %vm2175, %v2121, %v2458
        %v2460 = vsel %vm2177, %v2122, %v2459
        %v2461 = vsel %vm2179, %v2251, %v2460
        %v2462 = vsel %vm2181, %v2347, %v2461
        %v2463 = vsel %vm2183, %v2443, %v2462
        %v2464 = vsel %vm2171, %v2127, %v2126
        %v2465 = vsel %vm2173, %v2128, %v2464
        %v2466 = vsel %vm2175, %v2129, %v2465
        %v2467 = vsel %vm2177, %v2130, %v2466
        %v2468 = vsel %vm2179, %v2252, %v2467
        %v2469 = vsel %vm2181, %v2348, %v2468
        %v2470 = vsel %vm2183, %v2444, %v2469
        %v2471 = vsel %vm2171, %v2135, %v2134
        %v2472 = vsel %vm2173, %v2136, %v2471
        %v2473 = vsel %vm2175, %v2137, %v2472
        %v2474 = vsel %vm2177, %v2138, %v2473
        %v2475 = vsel %vm2179, %v2253, %v2474
        %v2476 = vsel %vm2181, %v2349, %v2475
        %v2477 = vsel %vm2183, %v2445, %v2476
        %v2478 = vsel %vm2171, %v2143, %v2142
        %v2479 = vsel %vm2173, %v2144, %v2478
        %v2480 = vsel %vm2175, %v2145, %v2479
        %v2481 = vsel %vm2177, %v2146, %v2480
        %v2482 = vsel %vm2179, %v2254, %v2481
        %v2483 = vsel %vm2181, %v2350, %v2482
        %v2484 = vsel %vm2183, %v2446, %v2483
        %v2485 = vsel %vm2171, %v2151, %v2150
        %v2486 = vsel %vm2173, %v2152, %v2485
        %v2487 = vsel %vm2175, %v2153, %v2486
        %v2488 = vsel %vm2177, %v2154, %v2487
        %v2489 = vsel %vm2179, %v2255, %v2488
        %v2490 = vsel %vm2181, %v2351, %v2489
        %v2491 = vsel %vm2183, %v2447, %v2490
        %v2492 = vsel %vm2171, %v2159, %v2158
        %v2493 = vsel %vm2173, %v2160, %v2492
        %v2494 = vsel %vm2175, %v2161, %v2493
        %v2495 = vsel %vm2177, %v2162, %v2494
        %v2496 = vsel %vm2179, %v2256, %v2495
        %v2497 = vsel %vm2181, %v2352, %v2496
        %v2498 = vsel %vm2183, %v2448, %v2497
        %v2499 = vsel %vm2171, %v2167, %v2166
        %v2500 = vsel %vm2173, %v2168, %v2499
        %v2501 = vsel %vm2175, %v2169, %v2500
        %v2502 = vsel %vm2177, %v2170, %v2501
        %v2503 = vsel %vm2179, %v2257, %v2502
        %v2504 = vsel %vm2181, %v2353, %v2503
        %v2505 = vsel %vm2183, %v2449, %v2504
        %2506 = vrot.lane.b32.xlu0 %v2456, 88
        %v2507 = vpop.permute.xlu0 %2506
        %2508 = vrot.lane.b32.xlu0 %v2463, 88
        %v2509 = vpop.permute.xlu0 %2508
        %2510 = vrot.lane.b32.xlu0 %v2470, 88
        %v2511 = vpop.permute.xlu0 %2510
        %2512 = vrot.lane.b32.xlu0 %v2477, 88
        %v2513 = vpop.permute.xlu0 %2512
        %2514 = vrot.lane.b32.xlu0 %v2484, 88
        %v2515 = vpop.permute.xlu0 %2514
        %2516 = vrot.lane.b32.xlu0 %v2491, 88
        %v2517 = vpop.permute.xlu0 %2516
        %2518 = vrot.lane.b32.xlu0 %v2498, 88
        %v2519 = vpop.permute.xlu0 %2518
        %2520 = vrot.lane.b32.xlu0 %v2505, 88
        %v2521 = vpop.permute.xlu0 %2520
        %v2538 = vperm.slane %v1958, 0
        %v2539 = vperm.slane %v1970, 0
        %v2540 = vperm.slane %v1982, 0
        %v2541 = vperm.slane %v1994, 0
        %v2542 = vperm.slane %v2006, 0
        %v2543 = vperm.slane %v2018, 0
        %v2544 = vperm.slane %v2030, 0
        %v2545 = vperm.slane %v2042, 0
        %v2546 = vsel %vm2171, %v2112, %v2111
        %v2547 = vsel %vm2173, %v2113, %v2546
        %v2548 = vsel %vm2175, %v2114, %v2547
        %v2549 = vsel %vm2177, %v2250, %v2548
        %v2550 = vsel %vm2179, %v2346, %v2549
        %v2551 = vsel %vm2181, %v2442, %v2550
        %v2552 = vsel %vm2183, %v2538, %v2551
        %v2553 = vsel %vm2171, %v2120, %v2119
        %v2554 = vsel %vm2173, %v2121, %v2553
        %v2555 = vsel %vm2175, %v2122, %v2554
        %v2556 = vsel %vm2177, %v2251, %v2555
        %v2557 = vsel %vm2179, %v2347, %v2556
        %v2558 = vsel %vm2181, %v2443, %v2557
        %v2559 = vsel %vm2183, %v2539, %v2558
        %v2560 = vsel %vm2171, %v2128, %v2127
        %v2561 = vsel %vm2173, %v2129, %v2560
        %v2562 = vsel %vm2175, %v2130, %v2561
        %v2563 = vsel %vm2177, %v2252, %v2562
        %v2564 = vsel %vm2179, %v2348, %v2563
        %v2565 = vsel %vm2181, %v2444, %v2564
        %v2566 = vsel %vm2183, %v2540, %v2565
        %v2567 = vsel %vm2171, %v2136, %v2135
        %v2568 = vsel %vm2173, %v2137, %v2567
        %v2569 = vsel %vm2175, %v2138, %v2568
        %v2570 = vsel %vm2177, %v2253, %v2569
        %v2571 = vsel %vm2179, %v2349, %v2570
        %v2572 = vsel %vm2181, %v2445, %v2571
        %v2573 = vsel %vm2183, %v2541, %v2572
        %v2574 = vsel %vm2171, %v2144, %v2143
        %v2575 = vsel %vm2173, %v2145, %v2574
        %v2576 = vsel %vm2175, %v2146, %v2575
        %v2577 = vsel %vm2177, %v2254, %v2576
        %v2578 = vsel %vm2179, %v2350, %v2577
        %v2579 = vsel %vm2181, %v2446, %v2578
        %v2580 = vsel %vm2183, %v2542, %v2579
        %v2581 = vsel %vm2171, %v2152, %v2151
        %v2582 = vsel %vm2173, %v2153, %v2581
        %v2583 = vsel %vm2175, %v2154, %v2582
        %v2584 = vsel %vm2177, %v2255, %v2583
        %v2585 = vsel %vm2179, %v2351, %v2584
        %v2586 = vsel %vm2181, %v2447, %v2585
        %v2587 = vsel %vm2183, %v2543, %v2586
        %v2588 = vsel %vm2171, %v2160, %v2159
        %v2589 = vsel %vm2173, %v2161, %v2588
        %v2590 = vsel %vm2175, %v2162, %v2589
        %v2591 = vsel %vm2177, %v2256, %v2590
        %v2592 = vsel %vm2179, %v2352, %v2591
        %v2593 = vsel %vm2181, %v2448, %v2592
        %v2594 = vsel %vm2183, %v2544, %v2593
        %v2595 = vsel %vm2171, %v2168, %v2167
        %v2596 = vsel %vm2173, %v2169, %v2595
        %v2597 = vsel %vm2175, %v2170, %v2596
        %v2598 = vsel %vm2177, %v2257, %v2597
        %v2599 = vsel %vm2179, %v2353, %v2598
        %v2600 = vsel %vm2181, %v2449, %v2599
        %v2601 = vsel %vm2183, %v2545, %v2600
        %2602 = vrot.lane.b32.xlu0 %v2552, 32
        %v2603 = vpop.permute.xlu0 %2602
        %2604 = vrot.lane.b32.xlu0 %v2559, 32
        %v2605 = vpop.permute.xlu0 %2604
        %2606 = vrot.lane.b32.xlu0 %v2566, 32
        %v2607 = vpop.permute.xlu0 %2606
        %2608 = vrot.lane.b32.xlu0 %v2573, 32
        %v2609 = vpop.permute.xlu0 %2608
        %2610 = vrot.lane.b32.xlu0 %v2580, 32
        %v2611 = vpop.permute.xlu0 %2610
        %2612 = vrot.lane.b32.xlu0 %v2587, 32
        %v2613 = vpop.permute.xlu0 %2612
        %2614 = vrot.lane.b32.xlu0 %v2594, 32
        %v2615 = vpop.permute.xlu0 %2614
        %2616 = vrot.lane.b32.xlu0 %v2601, 32
        %v2617 = vpop.permute.xlu0 %2616
        %vm2626 = vcmask 588800
        %v2627 = vsel %vm2626, %v2184, %v2315
        %v2628 = vsel %vm2626, %v2191, %v2317
        %v2629 = vsel %vm2626, %v2198, %v2319
        %v2630 = vsel %vm2626, %v2205, %v2321
        %v2631 = vsel %vm2626, %v2212, %v2323
        %v2632 = vsel %vm2626, %v2219, %v2325
        %v2633 = vsel %vm2626, %v2226, %v2327
        %v2634 = vsel %vm2626, %v2233, %v2329
        %vm2635 = vcmask 130048
        %v2636 = vsel %vm2635, %v2315, %v2411
        %v2637 = vsel %vm2635, %v2317, %v2413
        %v2638 = vsel %vm2635, %v2319, %v2415
        %v2639 = vsel %vm2635, %v2321, %v2417
        %v2640 = vsel %vm2635, %v2323, %v2419
        %v2641 = vsel %vm2635, %v2325, %v2421
        %v2642 = vsel %vm2635, %v2327, %v2423
        %v2643 = vsel %vm2635, %v2329, %v2425
        %vm2644 = vcmask 719872
        %v2645 = vsel %vm2644, %v2636, %v2507
        %v2646 = vsel %vm2644, %v2637, %v2509
        %v2647 = vsel %vm2644, %v2638, %v2511
        %v2648 = vsel %vm2644, %v2639, %v2513
        %v2649 = vsel %vm2644, %v2640, %v2515
        %v2650 = vsel %vm2644, %v2641, %v2517
        %v2651 = vsel %vm2644, %v2642, %v2519
        %v2652 = vsel %vm2644, %v2643, %v2521
        %vm2653 = vcmask 261120
        %v2654 = vsel %vm2653, %v2507, %v2603
        %v2655 = vsel %vm2653, %v2509, %v2605
        %v2656 = vsel %vm2653, %v2511, %v2607
        %v2657 = vsel %vm2653, %v2513, %v2609
        %v2658 = vsel %vm2653, %v2515, %v2611
        %v2659 = vsel %vm2653, %v2517, %v2613
        %v2660 = vsel %vm2653, %v2519, %v2615
        %v2661 = vsel %vm2653, %v2521, %v2617
        %v2662 = vld [vmem:[%s4] sm:$0xff]
        %v2663 = vld [vmem:[%s4 + $0x8] sm:$0xff]
        %v2664 = vld [vmem:[%s4 + $0x10] sm:$0xff]
        %v2665 = vld [vmem:[%s4 + $0x18] sm:$0xff]
        %v2666 = vld [vmem:[%s4 + $0x20] sm:$0xff]
        %v2667 = vld [vmem:[%s4 + $0x28] sm:$0xff]
        %v2668 = vld [vmem:[%s4 + $0x30] sm:$0xff]
        %v2669 = vld [vmem:[%s4 + $0x38] sm:$0xff]
        %v2670 = vld [vmem:[%s4 + $0x40] sm:$0xff]
        %v2671 = vld [vmem:[%s4 + $0x48] sm:$0xff]
        %v2672 = vld [vmem:[%s4 + $0x50] sm:$0xff]
        %v2673 = vld [vmem:[%s4 + $0x58] sm:$0xff]
        %v2674 = vld [vmem:[%s4 + $0x60] sm:$0xff]
        %v2675 = vld [vmem:[%s4 + $0x68] sm:$0xff]
        %v2676 = vld [vmem:[%s4 + $0x70] sm:$0xff]
        %v2677 = vld [vmem:[%s4 + $0x78] sm:$0xff]
        %v2678 = vld [vmem:[%s4 + $0x80] sm:$0xff]
        %v2679 = vld [vmem:[%s4 + $0x88] sm:$0xff]
        %v2680 = vld [vmem:[%s4 + $0x90] sm:$0xff]
        %v2681 = vld [vmem:[%s4 + $0x98] sm:$0xff]
        %v2682 = vld [vmem:[%s4 + $0xa0] sm:$0xff]
        %v2683 = vld [vmem:[%s4 + $0xa8] sm:$0xff]
        %v2684 = vld [vmem:[%s4 + $0xb0] sm:$0xff]
        %v2685 = vld [vmem:[%s4 + $0xb8] sm:$0xff]
        %v2686 = vld [vmem:[%s4 + $0xc0] sm:$0xff]
        %v2687 = vld [vmem:[%s4 + $0xc8] sm:$0xff]
        %v2688 = vld [vmem:[%s4 + $0xd0] sm:$0xff]
        %v2689 = vld [vmem:[%s4 + $0xd8] sm:$0xff]
        %v2690 = vld [vmem:[%s4 + $0xe0] sm:$0xff]
        %v2691 = vld [vmem:[%s4 + $0xe8] sm:$0xff]
        %v2692 = vld [vmem:[%s4 + $0xf0] sm:$0xff]
        %v2693 = vld [vmem:[%s4 + $0xf8] sm:$0xff]
        %v2694 = vld [vmem:[%s4 + $0x100] sm:$0xff]
        %v2695 = vld [vmem:[%s4 + $0x108] sm:$0xff]
        %v2696 = vld [vmem:[%s4 + $0x110] sm:$0xff]
        %v2697 = vld [vmem:[%s4 + $0x118] sm:$0xff]
        %v2698 = vld [vmem:[%s4 + $0x120] sm:$0xff]
        %v2699 = vld [vmem:[%s4 + $0x128] sm:$0xff]
        %v2700 = vld [vmem:[%s4 + $0x130] sm:$0xff]
        %v2701 = vld [vmem:[%s4 + $0x138] sm:$0xff]
        %v2702 = vld [vmem:[%s4 + $0x140] sm:$0xff]
        %v2703 = vld [vmem:[%s4 + $0x148] sm:$0xff]
        %v2704 = vld [vmem:[%s4 + $0x150] sm:$0xff]
        %v2705 = vld [vmem:[%s4 + $0x158] sm:$0xff]
        %v2706 = vld [vmem:[%s4 + $0x160] sm:$0xff]
        %v2707 = vld [vmem:[%s6] sm:$0x1]
        %v2709 = vperm.slane %v2707, 0
        %vm2711 = vcmask 850944
        %v2713 = vsel %vm2711, %v2654, 0
        %v2716 = vsel %vm2711, %v2655, 0
        %v2719 = vsel %vm2711, %v2656, 0
        %v2722 = vsel %vm2711, %v2657, 0
        %v2725 = vsel %vm2711, %v2658, 0
        %v2728 = vsel %vm2711, %v2659, 0
        %v2731 = vsel %vm2711, %v2660, 0
        %v2734 = vsel %vm2711, %v2661, 0
        %2736 = vmatpush.msra.mxu0 %v2677
        %2737 = vmatpush.msra.mxu0 %v2676
        %2738 = vmatpush.msra.mxu0 %v2675
        %2739 = vmatpush.msra.mxu0 %v2674
        %2740 = vmatpush.msra.mxu0 %v2673
        %2741 = vmatpush.msra.mxu0 %v2672
        %2742 = vmatpush.msra.mxu0 %v2671
        %2743 = vmatpush.msra.mxu0 %v2670
        %2744 = vmatpush.msra.mxu0 %v2669
        %2745 = vmatpush.msra.mxu0 %v2668
        %2746 = vmatpush.msra.mxu0 %v2667
        %2747 = vmatpush.msra.mxu0 %v2666
        %2748 = vmatpush.msra.mxu0 %v2665
        %2749 = vmatpush.msra.mxu0 %v2664
        %2750 = vmatpush.msra.mxu0 %v2663
        %2751 = vmatpush.msra.mxu0 %v2662
        %2752 = vmatmul.f32.gmra.mxu0 %v2627
        %v2753 = vpop.f32.mrf.mxu0
        %v2754 = vadd.f32 %v2709, %v2753
        %2755 = vmatmul.f32.gmra.mxu0 %v2628
        %v2756 = vpop.f32.mrf.mxu0
        %v2757 = vadd.f32 %v2709, %v2756
        %2758 = vmatmul.f32.gmra.mxu0 %v2629
        %v2759 = vpop.f32.mrf.mxu0
        %v2760 = vadd.f32 %v2709, %v2759
        %2761 = vmatmul.f32.gmra.mxu0 %v2630
        %v2762 = vpop.f32.mrf.mxu0
        %v2763 = vadd.f32 %v2709, %v2762
        %2764 = vmatmul.f32.gmra.mxu0 %v2631
        %v2765 = vpop.f32.mrf.mxu0
        %v2766 = vadd.f32 %v2709, %v2765
        %2767 = vmatmul.f32.gmra.mxu0 %v2632
        %v2768 = vpop.f32.mrf.mxu0
        %v2769 = vadd.f32 %v2709, %v2768
        %2770 = vmatmul.f32.gmra.mxu0 %v2633
        %v2771 = vpop.f32.mrf.mxu0
        %v2772 = vadd.f32 %v2709, %v2771
        %2773 = vmatmul.f32.gmra.mxu0 %v2634
        %v2774 = vpop.f32.mrf.mxu0
        %v2775 = vadd.f32 %v2709, %v2774
        %2776 = vdwg.mxu0
        %2777 = vmatpush.msra.mxu0 %v2693
        %2778 = vmatpush.msra.mxu0 %v2692
        %2779 = vmatpush.msra.mxu0 %v2691
        %2780 = vmatpush.msra.mxu0 %v2690
        %2781 = vmatpush.msra.mxu0 %v2689
        %2782 = vmatpush.msra.mxu0 %v2688
        %2783 = vmatpush.msra.mxu0 %v2687
        %2784 = vmatpush.msra.mxu0 %v2686
        %2785 = vmatpush.msra.mxu0 %v2685
        %2786 = vmatpush.msra.mxu0 %v2684
        %2787 = vmatpush.msra.mxu0 %v2683
        %2788 = vmatpush.msra.mxu0 %v2682
        %2789 = vmatpush.msra.mxu0 %v2681
        %2790 = vmatpush.msra.mxu0 %v2680
        %2791 = vmatpush.msra.mxu0 %v2679
        %2792 = vmatpush.msra.mxu0 %v2678
        %2793 = vmatmul.f32.gmra.mxu0 %v2645
        %v2794 = vpop.f32.mrf.mxu0
        %v2795 = vadd.f32 %v2754, %v2794
        %2796 = vmatmul.f32.gmra.mxu0 %v2646
        %v2797 = vpop.f32.mrf.mxu0
        %v2798 = vadd.f32 %v2757, %v2797
        %2799 = vmatmul.f32.gmra.mxu0 %v2647
        %v2800 = vpop.f32.mrf.mxu0
        %v2801 = vadd.f32 %v2760, %v2800
        %2802 = vmatmul.f32.gmra.mxu0 %v2648
        %v2803 = vpop.f32.mrf.mxu0
        %v2804 = vadd.f32 %v2763, %v2803
        %2805 = vmatmul.f32.gmra.mxu0 %v2649
        %v2806 = vpop.f32.mrf.mxu0
        %v2807 = vadd.f32 %v2766, %v2806
        %2808 = vmatmul.f32.gmra.mxu0 %v2650
        %v2809 = vpop.f32.mrf.mxu0
        %v2810 = vadd.f32 %v2769, %v2809
        %2811 = vmatmul.f32.gmra.mxu0 %v2651
        %v2812 = vpop.f32.mrf.mxu0
        %v2813 = vadd.f32 %v2772, %v2812
        %2814 = vmatmul.f32.gmra.mxu0 %v2652
        %v2815 = vpop.f32.mrf.mxu0
        %v2816 = vadd.f32 %v2775, %v2815
        %2817 = vdwg.mxu0
        %2818 = vmatpush.msra.mxu0 0.0
        %2819 = vmatpush.msra.mxu0 0.0
        %2820 = vmatpush.msra.mxu0 0.0
        %2821 = vmatpush.msra.mxu0 %v2706
        %2822 = vmatpush.msra.mxu0 %v2705
        %2823 = vmatpush.msra.mxu0 %v2704
        %2824 = vmatpush.msra.mxu0 %v2703
        %2825 = vmatpush.msra.mxu0 %v2702
        %2826 = vmatpush.msra.mxu0 %v2701
        %2827 = vmatpush.msra.mxu0 %v2700
        %2828 = vmatpush.msra.mxu0 %v2699
        %2829 = vmatpush.msra.mxu0 %v2698
        %2830 = vmatpush.msra.mxu0 %v2697
        %2831 = vmatpush.msra.mxu0 %v2696
        %2832 = vmatpush.msra.mxu0 %v2695
        %2833 = vmatpush.msra.mxu0 %v2694
        %2834 = vmatmul.f32.gmra.mxu0 %v2713
        %v2835 = vpop.f32.mrf.mxu0
        %v2836 = vadd.f32 %v2795, %v2835
        %2837 = vmatmul.f32.gmra.mxu0 %v2716
        %v2838 = vpop.f32.mrf.mxu0
        %v2839 = vadd.f32 %v2798, %v2838
        %2840 = vmatmul.f32.gmra.mxu0 %v2719
        %v2841 = vpop.f32.mrf.mxu0
        %v2842 = vadd.f32 %v2801, %v2841
        %2843 = vmatmul.f32.gmra.mxu0 %v2722
        %v2844 = vpop.f32.mrf.mxu0
        %v2845 = vadd.f32 %v2804, %v2844
        %2846 = vmatmul.f32.gmra.mxu0 %v2725
        %v2847 = vpop.f32.mrf.mxu0
        %v2848 = vadd.f32 %v2807, %v2847
        %2849 = vmatmul.f32.gmra.mxu0 %v2728
        %v2850 = vpop.f32.mrf.mxu0
        %v2851 = vadd.f32 %v2810, %v2850
        %2852 = vmatmul.f32.gmra.mxu0 %v2731
        %v2853 = vpop.f32.mrf.mxu0
        %v2854 = vadd.f32 %v2813, %v2853
        %2855 = vmatmul.f32.gmra.mxu0 %v2734
        %v2856 = vpop.f32.mrf.mxu0
        %v2857 = vadd.f32 %v2816, %v2856
        %2858 = vdwg.mxu0
        %v2859 = vld [vmem:[%s5] sm:$0xff]
        %v2860 = vld [vmem:[%s5 + $0x8] sm:$0xff]
        %v2861 = vld [vmem:[%s5 + $0x10] sm:$0xff]
        %v2862 = vld [vmem:[%s5 + $0x18] sm:$0xff]
        %v2863 = vld [vmem:[%s5 + $0x20] sm:$0xff]
        %v2864 = vld [vmem:[%s5 + $0x28] sm:$0xff]
        %v2865 = vld [vmem:[%s5 + $0x30] sm:$0xff]
        %v2866 = vld [vmem:[%s5 + $0x38] sm:$0xff]
        %v2867 = vld [vmem:[%s5 + $0x40] sm:$0xff]
        %v2868 = vld [vmem:[%s5 + $0x48] sm:$0xff]
        %v2869 = vld [vmem:[%s5 + $0x50] sm:$0xff]
        %v2870 = vld [vmem:[%s5 + $0x58] sm:$0xff]
        %v2871 = vld [vmem:[%s5 + $0x60] sm:$0xff]
        %v2872 = vld [vmem:[%s5 + $0x68] sm:$0xff]
        %v2873 = vld [vmem:[%s5 + $0x70] sm:$0xff]
        %v2874 = vld [vmem:[%s5 + $0x78] sm:$0xff]
        %v2875 = vld [vmem:[%s5 + $0x80] sm:$0xff]
        %v2876 = vld [vmem:[%s5 + $0x88] sm:$0xff]
        %v2877 = vld [vmem:[%s5 + $0x90] sm:$0xff]
        %v2878 = vld [vmem:[%s5 + $0x98] sm:$0xff]
        %v2879 = vld [vmem:[%s5 + $0xa0] sm:$0xff]
        %v2880 = vld [vmem:[%s5 + $0xa8] sm:$0xff]
        %v2881 = vld [vmem:[%s5 + $0xb0] sm:$0xff]
        %v2882 = vld [vmem:[%s5 + $0xb8] sm:$0xff]
        %v2883 = vld [vmem:[%s5 + $0xc0] sm:$0xff]
        %v2884 = vld [vmem:[%s5 + $0xc8] sm:$0xff]
        %v2885 = vld [vmem:[%s5 + $0xd0] sm:$0xff]
        %v2886 = vld [vmem:[%s5 + $0xd8] sm:$0xff]
        %v2887 = vld [vmem:[%s5 + $0xe0] sm:$0xff]
        %v2888 = vld [vmem:[%s5 + $0xe8] sm:$0xff]
        %v2889 = vld [vmem:[%s5 + $0xf0] sm:$0xff]
        %v2890 = vld [vmem:[%s5 + $0xf8] sm:$0xff]
        %v2891 = vld [vmem:[%s5 + $0x100] sm:$0xff]
        %v2892 = vld [vmem:[%s5 + $0x108] sm:$0xff]
        %v2893 = vld [vmem:[%s5 + $0x110] sm:$0xff]
        %v2894 = vld [vmem:[%s5 + $0x118] sm:$0xff]
        %v2895 = vld [vmem:[%s5 + $0x120] sm:$0xff]
        %v2896 = vld [vmem:[%s5 + $0x128] sm:$0xff]
        %v2897 = vld [vmem:[%s5 + $0x130] sm:$0xff]
        %v2898 = vld [vmem:[%s5 + $0x138] sm:$0xff]
        %v2899 = vld [vmem:[%s5 + $0x140] sm:$0xff]
        %v2900 = vld [vmem:[%s5 + $0x148] sm:$0xff]
        %v2901 = vld [vmem:[%s5 + $0x150] sm:$0xff]
        %v2902 = vld [vmem:[%s5 + $0x158] sm:$0xff]
        %v2903 = vld [vmem:[%s5 + $0x160] sm:$0xff]
        %2904 = vmatpush.msra.mxu0 %v2874
        %2905 = vmatpush.msra.mxu0 %v2873
        %2906 = vmatpush.msra.mxu0 %v2872
        %2907 = vmatpush.msra.mxu0 %v2871
        %2908 = vmatpush.msra.mxu0 %v2870
        %2909 = vmatpush.msra.mxu0 %v2869
        %2910 = vmatpush.msra.mxu0 %v2868
        %2911 = vmatpush.msra.mxu0 %v2867
        %2912 = vmatpush.msra.mxu0 %v2866
        %2913 = vmatpush.msra.mxu0 %v2865
        %2914 = vmatpush.msra.mxu0 %v2864
        %2915 = vmatpush.msra.mxu0 %v2863
        %2916 = vmatpush.msra.mxu0 %v2862
        %2917 = vmatpush.msra.mxu0 %v2861
        %2918 = vmatpush.msra.mxu0 %v2860
        %2919 = vmatpush.msra.mxu0 %v2859
        %2920 = vmatmul.f32.gmra.mxu0 %v2627
        %v2921 = vpop.f32.mrf.mxu0
        %v2922 = vadd.f32 %v2709, %v2921
        %2923 = vmatmul.f32.gmra.mxu0 %v2628
        %v2924 = vpop.f32.mrf.mxu0
        %v2925 = vadd.f32 %v2709, %v2924
        %2926 = vmatmul.f32.gmra.mxu0 %v2629
        %v2927 = vpop.f32.mrf.mxu0
        %v2928 = vadd.f32 %v2709, %v2927
        %2929 = vmatmul.f32.gmra.mxu0 %v2630
        %v2930 = vpop.f32.mrf.mxu0
        %v2931 = vadd.f32 %v2709, %v2930
        %2932 = vmatmul.f32.gmra.mxu0 %v2631
        %v2933 = vpop.f32.mrf.mxu0
        %v2934 = vadd.f32 %v2709, %v2933
        %2935 = vmatmul.f32.gmra.mxu0 %v2632
        %v2936 = vpop.f32.mrf.mxu0
        %v2937 = vadd.f32 %v2709, %v2936
        %2938 = vmatmul.f32.gmra.mxu0 %v2633
        %v2939 = vpop.f32.mrf.mxu0
        %v2940 = vadd.f32 %v2709, %v2939
        %2941 = vmatmul.f32.gmra.mxu0 %v2634
        %v2942 = vpop.f32.mrf.mxu0
        %v2943 = vadd.f32 %v2709, %v2942
        %2944 = vdwg.mxu0
        %2945 = vmatpush.msra.mxu0 %v2890
        %2946 = vmatpush.msra.mxu0 %v2889
        %2947 = vmatpush.msra.mxu0 %v2888
        %2948 = vmatpush.msra.mxu0 %v2887
        %2949 = vmatpush.msra.mxu0 %v2886
        %2950 = vmatpush.msra.mxu0 %v2885
        %2951 = vmatpush.msra.mxu0 %v2884
        %2952 = vmatpush.msra.mxu0 %v2883
        %2953 = vmatpush.msra.mxu0 %v2882
        %2954 = vmatpush.msra.mxu0 %v2881
        %2955 = vmatpush.msra.mxu0 %v2880
        %2956 = vmatpush.msra.mxu0 %v2879
        %2957 = vmatpush.msra.mxu0 %v2878
        %2958 = vmatpush.msra.mxu0 %v2877
        %2959 = vmatpush.msra.mxu0 %v2876
        %2960 = vmatpush.msra.mxu0 %v2875
        %2961 = vmatmul.f32.gmra.mxu0 %v2645
        %v2962 = vpop.f32.mrf.mxu0
        %v2963 = vadd.f32 %v2922, %v2962
        %2964 = vmatmul.f32.gmra.mxu0 %v2646
        %v2965 = vpop.f32.mrf.mxu0
        %v2966 = vadd.f32 %v2925, %v2965
        %2967 = vmatmul.f32.gmra.mxu0 %v2647
        %v2968 = vpop.f32.mrf.mxu0
        %v2969 = vadd.f32 %v2928, %v2968
        %2970 = vmatmul.f32.gmra.mxu0 %v2648
        %v2971 = vpop.f32.mrf.mxu0
        %v2972 = vadd.f32 %v2931, %v2971
        %2973 = vmatmul.f32.gmra.mxu0 %v2649
        %v2974 = vpop.f32.mrf.mxu0
        %v2975 = vadd.f32 %v2934, %v2974
        %2976 = vmatmul.f32.gmra.mxu0 %v2650
        %v2977 = vpop.f32.mrf.mxu0
        %v2978 = vadd.f32 %v2937, %v2977
        %2979 = vmatmul.f32.gmra.mxu0 %v2651
        %v2980 = vpop.f32.mrf.mxu0
        %v2981 = vadd.f32 %v2940, %v2980
        %2982 = vmatmul.f32.gmra.mxu0 %v2652
        %v2983 = vpop.f32.mrf.mxu0
        %v2984 = vadd.f32 %v2943, %v2983
        %2985 = vdwg.mxu0
        %2986 = vmatpush.msra.mxu0 0.0
        %2987 = vmatpush.msra.mxu0 0.0
        %2988 = vmatpush.msra.mxu0 0.0
        %2989 = vmatpush.msra.mxu0 %v2903
        %2990 = vmatpush.msra.mxu0 %v2902
        %2991 = vmatpush.msra.mxu0 %v2901
        %2992 = vmatpush.msra.mxu0 %v2900
        %2993 = vmatpush.msra.mxu0 %v2899
        %2994 = vmatpush.msra.mxu0 %v2898
        %2995 = vmatpush.msra.mxu0 %v2897
        %2996 = vmatpush.msra.mxu0 %v2896
        %2997 = vmatpush.msra.mxu0 %v2895
        %2998 = vmatpush.msra.mxu0 %v2894
        %2999 = vmatpush.msra.mxu0 %v2893
        %3000 = vmatpush.msra.mxu0 %v2892
        %3001 = vmatpush.msra.mxu0 %v2891
        %3002 = vmatmul.f32.gmra.mxu0 %v2713
        %v3003 = vpop.f32.mrf.mxu0
        %v3004 = vadd.f32 %v2963, %v3003
        %3005 = vmatmul.f32.gmra.mxu0 %v2716
        %v3006 = vpop.f32.mrf.mxu0
        %v3007 = vadd.f32 %v2966, %v3006
        %3008 = vmatmul.f32.gmra.mxu0 %v2719
        %v3009 = vpop.f32.mrf.mxu0
        %v3010 = vadd.f32 %v2969, %v3009
        %3011 = vmatmul.f32.gmra.mxu0 %v2722
        %v3012 = vpop.f32.mrf.mxu0
        %v3013 = vadd.f32 %v2972, %v3012
        %3014 = vmatmul.f32.gmra.mxu0 %v2725
        %v3015 = vpop.f32.mrf.mxu0
        %v3016 = vadd.f32 %v2975, %v3015
        %3017 = vmatmul.f32.gmra.mxu0 %v2728
        %v3018 = vpop.f32.mrf.mxu0
        %v3019 = vadd.f32 %v2978, %v3018
        %3020 = vmatmul.f32.gmra.mxu0 %v2731
        %v3021 = vpop.f32.mrf.mxu0
        %v3022 = vadd.f32 %v2981, %v3021
        %3023 = vmatmul.f32.gmra.mxu0 %v2734
        %v3024 = vpop.f32.mrf.mxu0
        %v3025 = vadd.f32 %v2984, %v3024
        %3026 = vdwg.mxu0
        %v3027 = vmax.f32 %v2836, %v3004
        %v3028 = vmax.f32 %v2839, %v3007
        %v3029 = vmax.f32 %v2842, %v3010
        %v3030 = vmax.f32 %v2845, %v3013
        %v3031 = vmax.f32 %v2848, %v3016
        %v3032 = vmax.f32 %v2851, %v3019
        %v3033 = vmax.f32 %v2854, %v3022
        %v3034 = vmax.f32 %v2857, %v3025
        %v3043 = vrot.slane %v3027, 2
        %v3044 = vrot.slane %v3027, 4
        %v3045 = vrot.slane %v3027, 6
        %v3046 = vrot.slane %v3028, 2
        %v3047 = vrot.slane %v3028, 4
        %v3048 = vrot.slane %v3028, 6
        %v3049 = vrot.slane %v3029, 2
        %v3050 = vrot.slane %v3029, 4
        %v3051 = vrot.slane %v3029, 6
        %v3052 = vrot.slane %v3030, 2
        %v3053 = vrot.slane %v3030, 4
        %v3054 = vrot.slane %v3030, 6
        %v3055 = vrot.slane %v3031, 2
        %v3056 = vrot.slane %v3031, 4
        %v3057 = vrot.slane %v3031, 6
        %v3058 = vrot.slane %v3032, 2
        %v3059 = vrot.slane %v3032, 4
        %v3060 = vrot.slane %v3032, 6
        %v3061 = vrot.slane %v3033, 2
        %v3062 = vrot.slane %v3033, 4
        %v3063 = vrot.slane %v3033, 6
        %v3064 = vrot.slane %v3034, 2
        %v3065 = vrot.slane %v3034, 4
        %v3066 = vrot.slane %v3034, 6
        %v3091 = vrot.slane %v3027, 7
        %v3092 = vrot.slane %v3091, 2
        %v3093 = vrot.slane %v3043, 7
        %v3094 = vrot.slane %v3093, 2
        %v3095 = vrot.slane %v3044, 7
        %v3096 = vrot.slane %v3095, 2
        %v3097 = vrot.slane %v3045, 7
        %v3098 = vrot.slane %v3097, 2
        %v3099 = vrot.slane %v3028, 7
        %v3100 = vrot.slane %v3099, 2
        %v3101 = vrot.slane %v3046, 7
        %v3102 = vrot.slane %v3101, 2
        %v3103 = vrot.slane %v3047, 7
        %v3104 = vrot.slane %v3103, 2
        %v3105 = vrot.slane %v3048, 7
        %v3106 = vrot.slane %v3105, 2
        %v3107 = vrot.slane %v3029, 7
        %v3108 = vrot.slane %v3107, 2
        %v3109 = vrot.slane %v3049, 7
        %v3110 = vrot.slane %v3109, 2
        %v3111 = vrot.slane %v3050, 7
        %v3112 = vrot.slane %v3111, 2
        %v3113 = vrot.slane %v3051, 7
        %v3114 = vrot.slane %v3113, 2
        %v3115 = vrot.slane %v3030, 7
        %v3116 = vrot.slane %v3115, 2
        %v3117 = vrot.slane %v3052, 7
        %v3118 = vrot.slane %v3117, 2
        %v3119 = vrot.slane %v3053, 7
        %v3120 = vrot.slane %v3119, 2
        %v3121 = vrot.slane %v3054, 7
        %v3122 = vrot.slane %v3121, 2
        %v3123 = vrot.slane %v3031, 7
        %v3124 = vrot.slane %v3123, 2
        %v3125 = vrot.slane %v3055, 7
        %v3126 = vrot.slane %v3125, 2
        %v3127 = vrot.slane %v3056, 7
        %v3128 = vrot.slane %v3127, 2
        %v3129 = vrot.slane %v3057, 7
        %v3130 = vrot.slane %v3129, 2
        %v3131 = vrot.slane %v3032, 7
        %v3132 = vrot.slane %v3131, 2
        %v3133 = vrot.slane %v3058, 7
        %v3134 = vrot.slane %v3133, 2
        %v3135 = vrot.slane %v3059, 7
        %v3136 = vrot.slane %v3135, 2
        %v3137 = vrot.slane %v3060, 7
        %v3138 = vrot.slane %v3137, 2
        %v3139 = vrot.slane %v3033, 7
        %v3140 = vrot.slane %v3139, 2
        %v3141 = vrot.slane %v3061, 7
        %v3142 = vrot.slane %v3141, 2
        %v3143 = vrot.slane %v3062, 7
        %v3144 = vrot.slane %v3143, 2
        %v3145 = vrot.slane %v3063, 7
        %v3146 = vrot.slane %v3145, 2
        %v3147 = vrot.slane %v3034, 7
        %v3148 = vrot.slane %v3147, 2
        %v3149 = vrot.slane %v3064, 7
        %v3150 = vrot.slane %v3149, 2
        %v3151 = vrot.slane %v3065, 7
        %v3152 = vrot.slane %v3151, 2
        %v3153 = vrot.slane %v3066, 7
        %v3154 = vrot.slane %v3153, 2
        %v3187 = vmax.f32 %v3027, %v3092
        %v3188 = vmax.f32 %v3043, %v3094
        %v3189 = vmax.f32 %v3044, %v3096
        %v3190 = vmax.f32 %v3045, %v3098
        %v3191 = vmax.f32 %v3028, %v3100
        %v3192 = vmax.f32 %v3046, %v3102
        %v3193 = vmax.f32 %v3047, %v3104
        %v3194 = vmax.f32 %v3048, %v3106
        %v3195 = vmax.f32 %v3029, %v3108
        %v3196 = vmax.f32 %v3049, %v3110
        %v3197 = vmax.f32 %v3050, %v3112
        %v3198 = vmax.f32 %v3051, %v3114
        %v3199 = vmax.f32 %v3030, %v3116
        %v3200 = vmax.f32 %v3052, %v3118
        %v3201 = vmax.f32 %v3053, %v3120
        %v3202 = vmax.f32 %v3054, %v3122
        %v3203 = vmax.f32 %v3031, %v3124
        %v3204 = vmax.f32 %v3055, %v3126
        %v3205 = vmax.f32 %v3056, %v3128
        %v3206 = vmax.f32 %v3057, %v3130
        %v3207 = vmax.f32 %v3032, %v3132
        %v3208 = vmax.f32 %v3058, %v3134
        %v3209 = vmax.f32 %v3059, %v3136
        %v3210 = vmax.f32 %v3060, %v3138
        %v3211 = vmax.f32 %v3033, %v3140
        %v3212 = vmax.f32 %v3061, %v3142
        %v3213 = vmax.f32 %v3062, %v3144
        %v3214 = vmax.f32 %v3063, %v3146
        %v3215 = vmax.f32 %v3034, %v3148
        %v3216 = vmax.f32 %v3064, %v3150
        %v3217 = vmax.f32 %v3065, %v3152
        %v3218 = vmax.f32 %v3066, %v3154
        %v3219 = vld [vmem:[%s8] sm:$0x1]
        %v3221 = vperm.slane %v3219, 0
        %v3223 = vadd.f32 %v3221, 0.0
        %v3224 = vld [vmem:[%s7] sm:$0xff]
        %v3225 = vld [vmem:[%s7 + $0x8] sm:$0xff]
        %v3226 = vld [vmem:[%s7 + $0x10] sm:$0xff]
        %v3227 = vld [vmem:[%s7 + $0x18] sm:$0xff]
        %v3228 = vld [vmem:[%s7 + $0x20] sm:$0xff]
        %v3229 = vld [vmem:[%s7 + $0x28] sm:$0xff]
        %v3230 = vld [vmem:[%s7 + $0x30] sm:$0xff]
        %v3231 = vld [vmem:[%s7 + $0x38] sm:$0xff]
        %v3240 = vperm.slane %v3187, 0
        %v3241 = vperm.slane %v3191, 0
        %v3242 = vperm.slane %v3195, 0
        %v3243 = vperm.slane %v3199, 0
        %v3244 = vperm.slane %v3203, 0
        %v3245 = vperm.slane %v3207, 0
        %v3246 = vperm.slane %v3211, 0
        %v3247 = vperm.slane %v3215, 0
        %v3248 = vsel %vm2171, %v3241, %v3240
        %v3249 = vsel %vm2173, %v3242, %v3248
        %v3250 = vsel %vm2175, %v3243, %v3249
        %v3251 = vsel %vm2177, %v3244, %v3250
        %v3252 = vsel %vm2179, %v3245, %v3251
        %v3253 = vsel %vm2181, %v3246, %v3252
        %v3254 = vsel %vm2183, %v3247, %v3253
        %vm3255 = vcmask 523264
        %v3256 = vsel %vm3255, %v3254, 0
        %3258 = vmatpush.msra.mxu0 0.0
        %3259 = vmatpush.msra.mxu0 0.0
        %3260 = vmatpush.msra.mxu0 0.0
        %3261 = vmatpush.msra.mxu0 0.0
        %3262 = vmatpush.msra.mxu0 0.0
        %3263 = vmatpush.msra.mxu0 0.0
        %3264 = vmatpush.msra.mxu0 0.0
        %3265 = vmatpush.msra.mxu0 0.0
        %3266 = vmatpush.msra.mxu0 %v3231
        %3267 = vmatpush.msra.mxu0 %v3230
        %3268 = vmatpush.msra.mxu0 %v3229
        %3269 = vmatpush.msra.mxu0 %v3228
        %3270 = vmatpush.msra.mxu0 %v3227
        %3271 = vmatpush.msra.mxu0 %v3226
        %3272 = vmatpush.msra.mxu0 %v3225
        %3273 = vmatpush.msra.mxu0 %v3224
        %3274 = vmatmul.f32.gmra.mxu0 %v3256
        %v3275 = vpop.f32.mrf.mxu0
        %v3276 = vadd.f32 0.0, %v3275
        %3277 = vdwg.mxu0
        %v3278 = vadd.f32 %v3223, %v3276
        %v3279 = vld [vmem:[%s7 + $0x40] sm:$0xff]
        %v3280 = vld [vmem:[%s7 + $0x48] sm:$0xff]
        %v3281 = vld [vmem:[%s7 + $0x50] sm:$0xff]
        %v3282 = vld [vmem:[%s7 + $0x58] sm:$0xff]
        %v3283 = vld [vmem:[%s7 + $0x60] sm:$0xff]
        %v3284 = vld [vmem:[%s7 + $0x68] sm:$0xff]
        %v3285 = vld [vmem:[%s7 + $0x70] sm:$0xff]
        %v3286 = vld [vmem:[%s7 + $0x78] sm:$0xff]
        %v3295 = vperm.slane %v3188, 0
        %v3296 = vperm.slane %v3192, 0
        %v3297 = vperm.slane %v3196, 0
        %v3298 = vperm.slane %v3200, 0
        %v3299 = vperm.slane %v3204, 0
        %v3300 = vperm.slane %v3208, 0
        %v3301 = vperm.slane %v3212, 0
        %v3302 = vperm.slane %v3216, 0
        %v3303 = vsel %vm2171, %v3296, %v3295
        %v3304 = vsel %vm2173, %v3297, %v3303
        %v3305 = vsel %vm2175, %v3298, %v3304
        %v3306 = vsel %vm2177, %v3299, %v3305
        %v3307 = vsel %vm2179, %v3300, %v3306
        %v3308 = vsel %vm2181, %v3301, %v3307
        %v3309 = vsel %vm2183, %v3302, %v3308
        %v3310 = vsel %vm3255, %v3309, 0
        %3312 = vmatpush.msra.mxu0 0.0
        %3313 = vmatpush.msra.mxu0 0.0
        %3314 = vmatpush.msra.mxu0 0.0
        %3315 = vmatpush.msra.mxu0 0.0
        %3316 = vmatpush.msra.mxu0 0.0
        %3317 = vmatpush.msra.mxu0 0.0
        %3318 = vmatpush.msra.mxu0 0.0
        %3319 = vmatpush.msra.mxu0 0.0
        %3320 = vmatpush.msra.mxu0 %v3286
        %3321 = vmatpush.msra.mxu0 %v3285
        %3322 = vmatpush.msra.mxu0 %v3284
        %3323 = vmatpush.msra.mxu0 %v3283
        %3324 = vmatpush.msra.mxu0 %v3282
        %3325 = vmatpush.msra.mxu0 %v3281
        %3326 = vmatpush.msra.mxu0 %v3280
        %3327 = vmatpush.msra.mxu0 %v3279
        %3328 = vmatmul.f32.gmra.mxu0 %v3310
        %v3329 = vpop.f32.mrf.mxu0
        %v3330 = vadd.f32 0.0, %v3329
        %3331 = vdwg.mxu0
        %v3332 = vadd.f32 %v3278, %v3330
        %v3333 = vld [vmem:[%s7 + $0x80] sm:$0xff]
        %v3334 = vld [vmem:[%s7 + $0x88] sm:$0xff]
        %v3335 = vld [vmem:[%s7 + $0x90] sm:$0xff]
        %v3336 = vld [vmem:[%s7 + $0x98] sm:$0xff]
        %v3337 = vld [vmem:[%s7 + $0xa0] sm:$0xff]
        %v3338 = vld [vmem:[%s7 + $0xa8] sm:$0xff]
        %v3339 = vld [vmem:[%s7 + $0xb0] sm:$0xff]
        %v3340 = vld [vmem:[%s7 + $0xb8] sm:$0xff]
        %v3349 = vperm.slane %v3189, 0
        %v3350 = vperm.slane %v3193, 0
        %v3351 = vperm.slane %v3197, 0
        %v3352 = vperm.slane %v3201, 0
        %v3353 = vperm.slane %v3205, 0
        %v3354 = vperm.slane %v3209, 0
        %v3355 = vperm.slane %v3213, 0
        %v3356 = vperm.slane %v3217, 0
        %v3357 = vsel %vm2171, %v3350, %v3349
        %v3358 = vsel %vm2173, %v3351, %v3357
        %v3359 = vsel %vm2175, %v3352, %v3358
        %v3360 = vsel %vm2177, %v3353, %v3359
        %v3361 = vsel %vm2179, %v3354, %v3360
        %v3362 = vsel %vm2181, %v3355, %v3361
        %v3363 = vsel %vm2183, %v3356, %v3362
        %v3364 = vsel %vm3255, %v3363, 0
        %3366 = vmatpush.msra.mxu0 0.0
        %3367 = vmatpush.msra.mxu0 0.0
        %3368 = vmatpush.msra.mxu0 0.0
        %3369 = vmatpush.msra.mxu0 0.0
        %3370 = vmatpush.msra.mxu0 0.0
        %3371 = vmatpush.msra.mxu0 0.0
        %3372 = vmatpush.msra.mxu0 0.0
        %3373 = vmatpush.msra.mxu0 0.0
        %3374 = vmatpush.msra.mxu0 %v3340
        %3375 = vmatpush.msra.mxu0 %v3339
        %3376 = vmatpush.msra.mxu0 %v3338
        %3377 = vmatpush.msra.mxu0 %v3337
        %3378 = vmatpush.msra.mxu0 %v3336
        %3379 = vmatpush.msra.mxu0 %v3335
        %3380 = vmatpush.msra.mxu0 %v3334
        %3381 = vmatpush.msra.mxu0 %v3333
        %3382 = vmatmul.f32.gmra.mxu0 %v3364
        %v3383 = vpop.f32.mrf.mxu0
        %v3384 = vadd.f32 0.0, %v3383
        %3385 = vdwg.mxu0
        %v3386 = vadd.f32 %v3332, %v3384
        %v3387 = vld [vmem:[%s7 + $0xc0] sm:$0xff]
        %v3388 = vld [vmem:[%s7 + $0xc8] sm:$0xff]
        %v3389 = vld [vmem:[%s7 + $0xd0] sm:$0xff]
        %v3390 = vld [vmem:[%s7 + $0xd8] sm:$0xff]
        %v3391 = vld [vmem:[%s7 + $0xe0] sm:$0xff]
        %v3392 = vld [vmem:[%s7 + $0xe8] sm:$0xff]
        %v3393 = vld [vmem:[%s7 + $0xf0] sm:$0xff]
        %v3394 = vld [vmem:[%s7 + $0xf8] sm:$0xff]
        %v3403 = vperm.slane %v3190, 0
        %v3404 = vperm.slane %v3194, 0
        %v3405 = vperm.slane %v3198, 0
        %v3406 = vperm.slane %v3202, 0
        %v3407 = vperm.slane %v3206, 0
        %v3408 = vperm.slane %v3210, 0
        %v3409 = vperm.slane %v3214, 0
        %v3410 = vperm.slane %v3218, 0
        %v3411 = vsel %vm2171, %v3404, %v3403
        %v3412 = vsel %vm2173, %v3405, %v3411
        %v3413 = vsel %vm2175, %v3406, %v3412
        %v3414 = vsel %vm2177, %v3407, %v3413
        %v3415 = vsel %vm2179, %v3408, %v3414
        %v3416 = vsel %vm2181, %v3409, %v3415
        %v3417 = vsel %vm2183, %v3410, %v3416
        %v3418 = vsel %vm3255, %v3417, 0
        %3420 = vmatpush.msra.mxu0 0.0
        %3421 = vmatpush.msra.mxu0 0.0
        %3422 = vmatpush.msra.mxu0 0.0
        %3423 = vmatpush.msra.mxu0 0.0
        %3424 = vmatpush.msra.mxu0 0.0
        %3425 = vmatpush.msra.mxu0 0.0
        %3426 = vmatpush.msra.mxu0 0.0
        %3427 = vmatpush.msra.mxu0 0.0
        %3428 = vmatpush.msra.mxu0 %v3394
        %3429 = vmatpush.msra.mxu0 %v3393
        %3430 = vmatpush.msra.mxu0 %v3392
        %3431 = vmatpush.msra.mxu0 %v3391
        %3432 = vmatpush.msra.mxu0 %v3390
        %3433 = vmatpush.msra.mxu0 %v3389
        %3434 = vmatpush.msra.mxu0 %v3388
        %3435 = vmatpush.msra.mxu0 %v3387
        %3436 = vmatmul.f32.gmra.mxu0 %v3418
        %v3437 = vpop.f32.mrf.mxu0
        %v3438 = vadd.f32 0.0, %v3437
        %3439 = vdwg.mxu0
        %v3440 = vadd.f32 %v3386, %v3438
        %vm3441 = vcmask 80896
        %3442 = vst.msk [vmem:[%s328] sm:$0xff] %vm3441, %v3440
        %s3443 = sand.u32 %s225, 1
        %s3444 = scalar_lea.sflag [#allocation3], %s3443
        %s3445 = sand.u32 %s225, 1
        %s3446 = smul.addr %s3445, 8
        %s3447 = scalar_lea.vmem [#allocation2], %s3446
        // Predicated region
        $region57: #{convnet_forward.1} parent=55 // pred_check
          %p3448 = pneg %p235
        $region58: #{convnet_forward.1} parent=55 // pred_check_branch
          %3450 = sbr.rel (%p3448) target = $region60
        $region59: #{convnet_forward.1} parent=55 // pred_region
          %3452 = vsyncadd %s3444, 0
          %s3453 = smul.addr %s23, 8
          %s3454 = scalar_lea.hbm %s9, %s3453
          %s3456 = sshll.u32 %s3447, 4
          %s3457 = int_to_ptr.vmem [resolvable:$true] %s3456
          %s3458 = sshll.u32 %s3454, 4
          %s3459 = int_to_ptr.hbm [resolvable:$true] %s3458
          %3461 = dma.vmem_to_hbm [thread:$0]  %s3457, 128, %s3459, %s3444
        $region60: #{convnet_forward.1} parent=55 // pred_fallthru
          _
      $region56: #{convnet_forward.1} parent=5 // pred_fallthru
        _
      %p3462 = scmp.le.s32.totalorder 2, %s18
      // Predicated region
      $region61: #{convnet_forward.1} parent=5 // pred_check
        %p3463 = pneg %p3462
      $region62: #{convnet_forward.1} parent=5 // pred_check_branch
        %3465 = sbr.rel (%p3463) target = $region64
      $region63: #{convnet_forward.1} parent=5 // pred_region
        %s3466 = ssub.s32 %s18, 2
        // Predicated region
        $region65: #{convnet_forward.1} parent=63 // pred_check
          %p3467 = pneg %p241
        $region66: #{convnet_forward.1} parent=63 // pred_check_branch
          %3469 = sbr.rel (%p3467) target = $region68
        $region67: #{convnet_forward.1} parent=63 // pred_region
          %s3470 = sand.u32 %s226, 1
          %s3471 = scalar_lea.sflag [#allocation3], %s3470
          %s3472 = sand.u32 %s226, 1
          %s3473 = smul.addr %s3472, 8
          %s3474 = scalar_lea.vmem [#allocation2], %s3473
          %3476 = dma.done %s3471, 128
        $region68: #{convnet_forward.1} parent=63 // pred_fallthru
          _
      $region64: #{convnet_forward.1} parent=5 // pred_fallthru
        _
    $region6: #{convnet_forward.1} parent=1 // loop_footer
      %s22 = sadd.s32 1, %s18
    $region7: #{convnet_forward.1} parent=1 // loop_footer_branch
      %17 = sbr.rel target = $region3
    $region8: #{convnet_forward.1} parent=1 // loop_exit
      _
    %3477 = vsyncpa [#allocation3], 1
    %s3478 = scalar_lea.sflag [#allocation3], 1
    %3479 = vsyncpa %s3478, 1

</llo_original>
